<compile_context>
chip_gen: v6e
topology: v6e:2x2x1
jax: 0.10.0
libtpu: 0.0.40
codegen_flags: <defaults>
</compile_context>

<pallas_src>
import functools

import jax
import jax.numpy as jnp
from jax.experimental import pallas as pl
from jax.experimental.pallas import tpu as pltpu


def _lstm_fc_kernel(x_ref, wih_ref, whh_ref, b_ref, wfc_ref, bfc_ref,
                    out_ref, xw_ref, *, seq_len, batch, hidden_size):
    """Single-shot LSTM(T steps) + Linear(H -> 1).

    x_ref   : (T*Bp, I)   flattened seq-major input (batch padded to Bp)
    wih_ref : (I, 4H)     W_ih^T
    whh_ref : (H, 4H)     W_hh^T
    b_ref   : (1, 4H)     b_ih + b_hh
    wfc_ref : (1, H)      fc weight row
    bfc_ref : (1, 1)      fc bias
    out_ref : (Bp, 1)
    xw_ref  : (T*Bp, 4H)  VMEM scratch holding the hoisted input projection
    """
    T, Bp, H = seq_len, batch, hidden_size

    # Hoisted input projection for ALL timesteps, stored to VMEM scratch so it
    # never occupies vregs across the recurrence.
    xw_ref[...] = (jnp.dot(x_ref[...], wih_ref[...],
                           preferred_element_type=jnp.float32)
                   + b_ref[...])                              # (T*Bp, 4H)

    h = jnp.zeros((Bp, H), jnp.float32)                       # 1 vreg (8x128)
    c = jnp.zeros((Bp, H), jnp.float32)

    # Fully unrolled recurrence (T is a small static constant).  Only the
    # h @ W_hh^T matmul sits on the serial critical path; W_hh and xw live in
    # VMEM and are read per step (no 64-vreg / 32-vreg live values -> no
    # spill traffic inside the chain).
    for t in range(T):
        gates = xw_ref[pl.ds(t * Bp, Bp), :] + jnp.dot(
            h, whh_ref[...], preferred_element_type=jnp.float32)   # (Bp, 4H)
        # PyTorch gate order: i, f, g, o.
        # sigmoid(x) == 0.5*tanh(0.5*x)+0.5 : one EUP pass per gate instead of
        # exp + reciprocal (two serial EUP passes).
        i_g = 0.5 * jnp.tanh(0.5 * gates[:, 0 * H:1 * H]) + 0.5
        f_g = 0.5 * jnp.tanh(0.5 * gates[:, 1 * H:2 * H]) + 0.5
        g_g = jnp.tanh(gates[:, 2 * H:3 * H])
        o_g = 0.5 * jnp.tanh(0.5 * gates[:, 3 * H:4 * H]) + 0.5
        c = f_g * c + i_g * g_g
        h = o_g * jnp.tanh(c)

    # Final FC: single output column -> VPU multiply + lane reduction instead
    # of an MXU pass.
    y = jnp.sum(h * wfc_ref[...], axis=-1, keepdims=True) + bfc_ref[...]
    out_ref[...] = y.astype(out_ref.dtype)


def lstm_forecast(x_btI, w_ih, w_hh, b_ih, b_hh, w_fc, b_fc):
    """x_btI: (B, T, I) float32 (PyTorch batch_first layout).
    Returns (B, 1), matching `self.fc(hidden).squeeze(0)`."""
    B, T, I = x_btI.shape
    H4 = w_ih.shape[0]
    H = H4 // 4

    # Pad batch to a full 8-sublane multiple so (Bp, H)/(Bp, 4H) tiles fill
    # vregs; padded rows are independent (zero inputs) and sliced off below.
    Bp = ((B + 7) // 8) * 8

    # Pre-transpose glue (plain JAX): seq-major flattened (T*Bp, I) input and
    # right-multiplied weights; biases folded together once.
    x_tbi = jnp.transpose(x_btI, (1, 0, 2)).astype(jnp.float32)     # (T, B, I)
    if Bp != B:
        x_tbi = jnp.pad(x_tbi, ((0, 0), (0, Bp - B), (0, 0)))
    x_flat = x_tbi.reshape(T * Bp, I)                               # (T*Bp, I)

    wih_t = jnp.transpose(w_ih).astype(jnp.float32)                 # (I, 4H)
    whh_t = jnp.transpose(w_hh).astype(jnp.float32)                 # (H, 4H)
    b = (b_ih + b_hh).astype(jnp.float32).reshape(1, 4 * H)         # (1, 4H)
    wfc_row = w_fc.astype(jnp.float32).reshape(1, H)                # (1, H)
    bfc = b_fc.astype(jnp.float32).reshape(1, 1)                    # (1, 1)

    kernel = functools.partial(
        _lstm_fc_kernel, seq_len=T, batch=Bp, hidden_size=H)

    # Single invocation, no grid: every operand (<1 MiB total) is brought into
    # VMEM once with a full-array spec — no per-step DMA / double-buffering.
    vmem_spec = lambda: pl.BlockSpec(memory_space=pltpu.MemorySpace.VMEM)
    out_padded = pl.pallas_call(
        kernel,
        out_shape=jax.ShapeDtypeStruct((Bp, 1), jnp.float32),
        in_specs=[vmem_spec() for _ in range(6)],
        out_specs=vmem_spec(),
        scratch_shapes=[pltpu.VMEM((T * Bp, 4 * H), jnp.float32)],
    )(x_flat, wih_t, whh_t, b, wfc_row, bfc)

    return out_padded[:B]


def reference_forward(x_btI, w_ih, w_hh, b_ih, b_hh, w_fc, b_fc):
    """Pure-JAX reference replicating torch.nn.LSTM + Linear semantics."""
    B, T, I = x_btI.shape
    H = w_hh.shape[1]

    def step(carry, x_t):
        h, c = carry
        gates = x_t @ w_ih.T + b_ih + h @ w_hh.T + b_hh
        i = jax.nn.sigmoid(gates[:, 0 * H:1 * H])
        f = jax.nn.sigmoid(gates[:, 1 * H:2 * H])
        g = jnp.tanh(gates[:, 2 * H:3 * H])
        o = jax.nn.sigmoid(gates[:, 3 * H:4 * H])
        c = f * c + i * g
        h = o * jnp.tanh(c)
        return (h, c), None

    h0 = jnp.zeros((B, H), jnp.float32)
    c0 = jnp.zeros((B, H), jnp.float32)
    (h, _), _ = jax.lax.scan(step, (h0, c0), jnp.transpose(x_btI, (1, 0, 2)))
    return h @ w_fc.T + b_fc


if __name__ == "__main__":
    INPUT_SIZE = 4
    HIDDEN = 128
    B, T = 2, 8

    key = jax.random.PRNGKey(0)
    ks = jax.random.split(key, 8)
    bound = 1.0 / jnp.sqrt(HIDDEN)

    # Deterministic synthetic parameters (PyTorch LSTM/Linear shapes).
    w_ih = jax.random.uniform(ks[0], (4 * HIDDEN, INPUT_SIZE), jnp.float32, -bound, bound)
    w_hh = jax.random.uniform(ks[1], (4 * HIDDEN, HIDDEN), jnp.float32, -bound, bound)
    b_ih = jax.random.uniform(ks[2], (4 * HIDDEN,), jnp.float32, -bound, bound)
    b_hh = jax.random.uniform(ks[3], (4 * HIDDEN,), jnp.float32, -bound, bound)
    w_fc = jax.random.uniform(ks[4], (1, HIDDEN), jnp.float32, -bound, bound)
    b_fc = jax.random.uniform(ks[5], (1,), jnp.float32, -bound, bound)

    x = jax.random.normal(ks[6], (B, T, INPUT_SIZE), jnp.float32)

    out = lstm_forecast(x, w_ih, w_hh, b_ih, b_hh, w_fc, b_fc)
    out = jax.block_until_ready(out)

    ref = reference_forward(x, w_ih, w_hh, b_ih, b_hh, w_fc, b_fc)
    assert out.shape == (B, 1), out.shape
    assert jnp.allclose(out, ref, atol=1e-4, rtol=1e-4), (out, ref)

    print("KERNEL_OK")
</pallas_src>

<mosaic_0001>
module attributes {stable_mosaic.version = 11 : i64} {
  func.func @_lstm_fc_kernel(%arg0: memref<64x4xf32, #tpu.memory_space<vmem>>, %arg1: memref<4x512xf32, #tpu.memory_space<vmem>>, %arg2: memref<128x512xf32, #tpu.memory_space<vmem>>, %arg3: memref<1x512xf32, #tpu.memory_space<vmem>>, %arg4: memref<1x128xf32, #tpu.memory_space<vmem>>, %arg5: memref<1x1xf32, #tpu.memory_space<vmem>>, %arg6: memref<8x1xf32, #tpu.memory_space<vmem>>, %arg7: memref<64x512xf32, #tpu.memory_space<vmem>>) attributes {dimension_semantics = [], scalar_prefetch = 0 : i64, scratch_operands = 1 : i64, tpu.core_type = #tpu.core_type<tc>} {
    %c0 = arith.constant 0 : index
    %c0_0 = arith.constant 0 : index
    %0 = vector.load %arg0[%c0, %c0_0] : memref<64x4xf32, #tpu.memory_space<vmem>>, vector<64x4xf32>
    %c0_1 = arith.constant 0 : index
    %c0_2 = arith.constant 0 : index
    %1 = vector.load %arg1[%c0_1, %c0_2] : memref<4x512xf32, #tpu.memory_space<vmem>>, vector<4x512xf32>
    %cst = arith.constant dense<0.000000e+00> : vector<64x512xf32>
    %2 = tpu.matmul %0, %1, %cst {dimension_numbers = #tpu.dot_dimension_numbers<[1], [0], [0], [1], [0, 0, 1, 1], [], []>} : vector<64x4xf32>, vector<4x512xf32>, vector<64x512xf32> -> vector<64x512xf32>
    %c0_3 = arith.constant 0 : index
    %c0_4 = arith.constant 0 : index
    %3 = vector.load %arg3[%c0_3, %c0_4] : memref<1x512xf32, #tpu.memory_space<vmem>>, vector<1x512xf32>
    %4 = vector.broadcast %3 : vector<1x512xf32> to vector<64x512xf32>
    %5 = arith.addf %2, %4 : vector<64x512xf32>
    %c0_5 = arith.constant 0 : index
    %c0_6 = arith.constant 0 : index
    %6 = vector.load %arg7[%c0_5, %c0_6] : memref<64x512xf32, #tpu.memory_space<vmem>>, vector<64x512xf32>
    tpu.vector_store %arg7[%c0_5, %c0_6], %5 {strides = array<i32>} : memref<64x512xf32, #tpu.memory_space<vmem>>, vector<64x512xf32>,
    %cst_7 = arith.constant 0.000000e+00 : f32
    %7 = vector.broadcast %cst_7 : f32 to vector<8x128xf32>
    %cst_8 = arith.constant 0.000000e+00 : f32
    %8 = vector.broadcast %cst_8 : f32 to vector<8x128xf32>
    %c0_9 = arith.constant 0 : index
    %c0_10 = arith.constant 0 : index
    %9 = vector.load %arg7[%c0_9, %c0_10] : memref<64x512xf32, #tpu.memory_space<vmem>>, vector<8x512xf32>
    %c0_11 = arith.constant 0 : index
    %c0_12 = arith.constant 0 : index
    %10 = vector.load %arg2[%c0_11, %c0_12] : memref<128x512xf32, #tpu.memory_space<vmem>>, vector<128x512xf32>
    %cst_13 = arith.constant dense<0.000000e+00> : vector<8x512xf32>
    %11 = tpu.matmul %7, %10, %cst_13 {dimension_numbers = #tpu.dot_dimension_numbers<[1], [0], [0], [1], [0, 0, 1, 1], [], []>} : vector<8x128xf32>, vector<128x512xf32>, vector<8x512xf32> -> vector<8x512xf32>
    %12 = arith.addf %9, %11 : vector<8x512xf32>
    %13 = vector.extract_strided_slice %12 {offsets = [0, 0], sizes = [8, 128], strides = [1, 1]} : vector<8x512xf32> to vector<8x128xf32>
    %cst_14 = arith.constant 5.000000e-01 : f32
    %14 = vector.broadcast %cst_14 : f32 to vector<8x128xf32>
    %15 = arith.mulf %14, %13 : vector<8x128xf32>
    %16 = math.tanh %15 : vector<8x128xf32>
    %cst_15 = arith.constant 5.000000e-01 : f32
    %17 = vector.broadcast %cst_15 : f32 to vector<8x128xf32>
    %18 = arith.mulf %17, %16 : vector<8x128xf32>
    %cst_16 = arith.constant 5.000000e-01 : f32
    %19 = vector.broadcast %cst_16 : f32 to vector<8x128xf32>
    %20 = arith.addf %18, %19 : vector<8x128xf32>
    %21 = vector.extract_strided_slice %12 {offsets = [0, 128], sizes = [8, 128], strides = [1, 1]} : vector<8x512xf32> to vector<8x128xf32>
    %cst_17 = arith.constant 5.000000e-01 : f32
    %22 = vector.broadcast %cst_17 : f32 to vector<8x128xf32>
    %23 = arith.mulf %22, %21 : vector<8x128xf32>
    %24 = math.tanh %23 : vector<8x128xf32>
    %cst_18 = arith.constant 5.000000e-01 : f32
    %25 = vector.broadcast %cst_18 : f32 to vector<8x128xf32>
    %26 = arith.mulf %25, %24 : vector<8x128xf32>
    %cst_19 = arith.constant 5.000000e-01 : f32
    %27 = vector.broadcast %cst_19 : f32 to vector<8x128xf32>
    %28 = arith.addf %26, %27 : vector<8x128xf32>
    %29 = vector.extract_strided_slice %12 {offsets = [0, 256], sizes = [8, 128], strides = [1, 1]} : vector<8x512xf32> to vector<8x128xf32>
    %30 = math.tanh %29 : vector<8x128xf32>
    %31 = vector.extract_strided_slice %12 {offsets = [0, 384], sizes = [8, 128], strides = [1, 1]} : vector<8x512xf32> to vector<8x128xf32>
    %cst_20 = arith.constant 5.000000e-01 : f32
    %32 = vector.broadcast %cst_20 : f32 to vector<8x128xf32>
    %33 = arith.mulf %32, %31 : vector<8x128xf32>
    %34 = math.tanh %33 : vector<8x128xf32>
    %cst_21 = arith.constant 5.000000e-01 : f32
    %35 = vector.broadcast %cst_21 : f32 to vector<8x128xf32>
    %36 = arith.mulf %35, %34 : vector<8x128xf32>
    %cst_22 = arith.constant 5.000000e-01 : f32
    %37 = vector.broadcast %cst_22 : f32 to vector<8x128xf32>
    %38 = arith.addf %36, %37 : vector<8x128xf32>
    %39 = arith.mulf %28, %8 : vector<8x128xf32>
    %40 = arith.mulf %20, %30 : vector<8x128xf32>
    %41 = arith.addf %39, %40 : vector<8x128xf32>
    %42 = math.tanh %41 : vector<8x128xf32>
    %43 = arith.mulf %38, %42 : vector<8x128xf32>
    %c8 = arith.constant 8 : index
    %c0_23 = arith.constant 0 : index
    %44 = vector.load %arg7[%c8, %c0_23] : memref<64x512xf32, #tpu.memory_space<vmem>>, vector<8x512xf32>
    %c0_24 = arith.constant 0 : index
    %c0_25 = arith.constant 0 : index
    %45 = vector.load %arg2[%c0_24, %c0_25] : memref<128x512xf32, #tpu.memory_space<vmem>>, vector<128x512xf32>
    %cst_26 = arith.constant dense<0.000000e+00> : vector<8x512xf32>
    %46 = tpu.matmul %43, %45, %cst_26 {dimension_numbers = #tpu.dot_dimension_numbers<[1], [0], [0], [1], [0, 0, 1, 1], [], []>} : vector<8x128xf32>, vector<128x512xf32>, vector<8x512xf32> -> vector<8x512xf32>
    %47 = arith.addf %44, %46 : vector<8x512xf32>
    %48 = vector.extract_strided_slice %47 {offsets = [0, 0], sizes = [8, 128], strides = [1, 1]} : vector<8x512xf32> to vector<8x128xf32>
    %cst_27 = arith.constant 5.000000e-01 : f32
    %49 = vector.broadcast %cst_27 : f32 to vector<8x128xf32>
    %50 = arith.mulf %49, %48 : vector<8x128xf32>
    %51 = math.tanh %50 : vector<8x128xf32>
    %cst_28 = arith.constant 5.000000e-01 : f32
    %52 = vector.broadcast %cst_28 : f32 to vector<8x128xf32>
    %53 = arith.mulf %52, %51 : vector<8x128xf32>
    %cst_29 = arith.constant 5.000000e-01 : f32
    %54 = vector.broadcast %cst_29 : f32 to vector<8x128xf32>
    %55 = arith.addf %53, %54 : vector<8x128xf32>
    %56 = vector.extract_strided_slice %47 {offsets = [0, 128], sizes = [8, 128], strides = [1, 1]} : vector<8x512xf32> to vector<8x128xf32>
    %cst_30 = arith.constant 5.000000e-01 : f32
    %57 = vector.broadcast %cst_30 : f32 to vector<8x128xf32>
    %58 = arith.mulf %57, %56 : vector<8x128xf32>
    %59 = math.tanh %58 : vector<8x128xf32>
    %cst_31 = arith.constant 5.000000e-01 : f32
    %60 = vector.broadcast %cst_31 : f32 to vector<8x128xf32>
    %61 = arith.mulf %60, %59 : vector<8x128xf32>
    %cst_32 = arith.constant 5.000000e-01 : f32
    %62 = vector.broadcast %cst_32 : f32 to vector<8x128xf32>
    %63 = arith.addf %61, %62 : vector<8x128xf32>
    %64 = vector.extract_strided_slice %47 {offsets = [0, 256], sizes = [8, 128], strides = [1, 1]} : vector<8x512xf32> to vector<8x128xf32>
    %65 = math.tanh %64 : vector<8x128xf32>
    %66 = vector.extract_strided_slice %47 {offsets = [0, 384], sizes = [8, 128], strides = [1, 1]} : vector<8x512xf32> to vector<8x128xf32>
    %cst_33 = arith.constant 5.000000e-01 : f32
    %67 = vector.broadcast %cst_33 : f32 to vector<8x128xf32>
    %68 = arith.mulf %67, %66 : vector<8x128xf32>
    %69 = math.tanh %68 : vector<8x128xf32>
    %cst_34 = arith.constant 5.000000e-01 : f32
    %70 = vector.broadcast %cst_34 : f32 to vector<8x128xf32>
    %71 = arith.mulf %70, %69 : vector<8x128xf32>
    %cst_35 = arith.constant 5.000000e-01 : f32
    %72 = vector.broadcast %cst_35 : f32 to vector<8x128xf32>
    %73 = arith.addf %71, %72 : vector<8x128xf32>
    %74 = arith.mulf %63, %41 : vector<8x128xf32>
    %75 = arith.mulf %55, %65 : vector<8x128xf32>
    %76 = arith.addf %74, %75 : vector<8x128xf32>
    %77 = math.tanh %76 : vector<8x128xf32>
    %78 = arith.mulf %73, %77 : vector<8x128xf32>
    %c16 = arith.constant 16 : index
    %c0_36 = arith.constant 0 : index
    %79 = vector.load %arg7[%c16, %c0_36] : memref<64x512xf32, #tpu.memory_space<vmem>>, vector<8x512xf32>
    %c0_37 = arith.constant 0 : index
    %c0_38 = arith.constant 0 : index
    %80 = vector.load %arg2[%c0_37, %c0_38] : memref<128x512xf32, #tpu.memory_space<vmem>>, vector<128x512xf32>
    %cst_39 = arith.constant dense<0.000000e+00> : vector<8x512xf32>
    %81 = tpu.matmul %78, %80, %cst_39 {dimension_numbers = #tpu.dot_dimension_numbers<[1], [0], [0], [1], [0, 0, 1, 1], [], []>} : vector<8x128xf32>, vector<128x512xf32>, vector<8x512xf32> -> vector<8x512xf32>
    %82 = arith.addf %79, %81 : vector<8x512xf32>
    %83 = vector.extract_strided_slice %82 {offsets = [0, 0], sizes = [8, 128], strides = [1, 1]} : vector<8x512xf32> to vector<8x128xf32>
    %cst_40 = arith.constant 5.000000e-01 : f32
    %84 = vector.broadcast %cst_40 : f32 to vector<8x128xf32>
    %85 = arith.mulf %84, %83 : vector<8x128xf32>
    %86 = math.tanh %85 : vector<8x128xf32>
    %cst_41 = arith.constant 5.000000e-01 : f32
    %87 = vector.broadcast %cst_41 : f32 to vector<8x128xf32>
    %88 = arith.mulf %87, %86 : vector<8x128xf32>
    %cst_42 = arith.constant 5.000000e-01 : f32
    %89 = vector.broadcast %cst_42 : f32 to vector<8x128xf32>
    %90 = arith.addf %88, %89 : vector<8x128xf32>
    %91 = vector.extract_strided_slice %82 {offsets = [0, 128], sizes = [8, 128], strides = [1, 1]} : vector<8x512xf32> to vector<8x128xf32>
    %cst_43 = arith.constant 5.000000e-01 : f32
    %92 = vector.broadcast %cst_43 : f32 to vector<8x128xf32>
    %93 = arith.mulf %92, %91 : vector<8x128xf32>
    %94 = math.tanh %93 : vector<8x128xf32>
    %cst_44 = arith.constant 5.000000e-01 : f32
    %95 = vector.broadcast %cst_44 : f32 to vector<8x128xf32>
    %96 = arith.mulf %95, %94 : vector<8x128xf32>
    %cst_45 = arith.constant 5.000000e-01 : f32
    %97 = vector.broadcast %cst_45 : f32 to vector<8x128xf32>
    %98 = arith.addf %96, %97 : vector<8x128xf32>
    %99 = vector.extract_strided_slice %82 {offsets = [0, 256], sizes = [8, 128], strides = [1, 1]} : vector<8x512xf32> to vector<8x128xf32>
    %100 = math.tanh %99 : vector<8x128xf32>
    %101 = vector.extract_strided_slice %82 {offsets = [0, 384], sizes = [8, 128], strides = [1, 1]} : vector<8x512xf32> to vector<8x128xf32>
    %cst_46 = arith.constant 5.000000e-01 : f32
    %102 = vector.broadcast %cst_46 : f32 to vector<8x128xf32>
    %103 = arith.mulf %102, %101 : vector<8x128xf32>
    %104 = math.tanh %103 : vector<8x128xf32>
    %cst_47 = arith.constant 5.000000e-01 : f32
    %105 = vector.broadcast %cst_47 : f32 to vector<8x128xf32>
    %106 = arith.mulf %105, %104 : vector<8x128xf32>
    %cst_48 = arith.constant 5.000000e-01 : f32
    %107 = vector.broadcast %cst_48 : f32 to vector<8x128xf32>
    %108 = arith.addf %106, %107 : vector<8x128xf32>
    %109 = arith.mulf %98, %76 : vector<8x128xf32>
    %110 = arith.mulf %90, %100 : vector<8x128xf32>
    %111 = arith.addf %109, %110 : vector<8x128xf32>
    %112 = math.tanh %111 : vector<8x128xf32>
    %113 = arith.mulf %108, %112 : vector<8x128xf32>
    %c24 = arith.constant 24 : index
    %c0_49 = arith.constant 0 : index
    %114 = vector.load %arg7[%c24, %c0_49] : memref<64x512xf32, #tpu.memory_space<vmem>>, vector<8x512xf32>
    %c0_50 = arith.constant 0 : index
    %c0_51 = arith.constant 0 : index
    %115 = vector.load %arg2[%c0_50, %c0_51] : memref<128x512xf32, #tpu.memory_space<vmem>>, vector<128x512xf32>
    %cst_52 = arith.constant dense<0.000000e+00> : vector<8x512xf32>
    %116 = tpu.matmul %113, %115, %cst_52 {dimension_numbers = #tpu.dot_dimension_numbers<[1], [0], [0], [1], [0, 0, 1, 1], [], []>} : vector<8x128xf32>, vector<128x512xf32>, vector<8x512xf32> -> vector<8x512xf32>
    %117 = arith.addf %114, %116 : vector<8x512xf32>
    %118 = vector.extract_strided_slice %117 {offsets = [0, 0], sizes = [8, 128], strides = [1, 1]} : vector<8x512xf32> to vector<8x128xf32>
    %cst_53 = arith.constant 5.000000e-01 : f32
    %119 = vector.broadcast %cst_53 : f32 to vector<8x128xf32>
    %120 = arith.mulf %119, %118 : vector<8x128xf32>
    %121 = math.tanh %120 : vector<8x128xf32>
    %cst_54 = arith.constant 5.000000e-01 : f32
    %122 = vector.broadcast %cst_54 : f32 to vector<8x128xf32>
    %123 = arith.mulf %122, %121 : vector<8x128xf32>
    %cst_55 = arith.constant 5.000000e-01 : f32
    %124 = vector.broadcast %cst_55 : f32 to vector<8x128xf32>
    %125 = arith.addf %123, %124 : vector<8x128xf32>
    %126 = vector.extract_strided_slice %117 {offsets = [0, 128], sizes = [8, 128], strides = [1, 1]} : vector<8x512xf32> to vector<8x128xf32>
    %cst_56 = arith.constant 5.000000e-01 : f32
    %127 = vector.broadcast %cst_56 : f32 to vector<8x128xf32>
    %128 = arith.mulf %127, %126 : vector<8x128xf32>
    %129 = math.tanh %128 : vector<8x128xf32>
    %cst_57 = arith.constant 5.000000e-01 : f32
    %130 = vector.broadcast %cst_57 : f32 to vector<8x128xf32>
    %131 = arith.mulf %130, %129 : vector<8x128xf32>
    %cst_58 = arith.constant 5.000000e-01 : f32
    %132 = vector.broadcast %cst_58 : f32 to vector<8x128xf32>
    %133 = arith.addf %131, %132 : vector<8x128xf32>
    %134 = vector.extract_strided_slice %117 {offsets = [0, 256], sizes = [8, 128], strides = [1, 1]} : vector<8x512xf32> to vector<8x128xf32>
    %135 = math.tanh %134 : vector<8x128xf32>
    %136 = vector.extract_strided_slice %117 {offsets = [0, 384], sizes = [8, 128], strides = [1, 1]} : vector<8x512xf32> to vector<8x128xf32>
    %cst_59 = arith.constant 5.000000e-01 : f32
    %137 = vector.broadcast %cst_59 : f32 to vector<8x128xf32>
    %138 = arith.mulf %137, %136 : vector<8x128xf32>
    %139 = math.tanh %138 : vector<8x128xf32>
    %cst_60 = arith.constant 5.000000e-01 : f32
    %140 = vector.broadcast %cst_60 : f32 to vector<8x128xf32>
    %141 = arith.mulf %140, %139 : vector<8x128xf32>
    %cst_61 = arith.constant 5.000000e-01 : f32
    %142 = vector.broadcast %cst_61 : f32 to vector<8x128xf32>
    %143 = arith.addf %141, %142 : vector<8x128xf32>
    %144 = arith.mulf %133, %111 : vector<8x128xf32>
    %145 = arith.mulf %125, %135 : vector<8x128xf32>
    %146 = arith.addf %144, %145 : vector<8x128xf32>
    %147 = math.tanh %146 : vector<8x128xf32>
    %148 = arith.mulf %143, %147 : vector<8x128xf32>
    %c32 = arith.constant 32 : index
    %c0_62 = arith.constant 0 : index
    %149 = vector.load %arg7[%c32, %c0_62] : memref<64x512xf32, #tpu.memory_space<vmem>>, vector<8x512xf32>
    %c0_63 = arith.constant 0 : index
    %c0_64 = arith.constant 0 : index
    %150 = vector.load %arg2[%c0_63, %c0_64] : memref<128x512xf32, #tpu.memory_space<vmem>>, vector<128x512xf32>
    %cst_65 = arith.constant dense<0.000000e+00> : vector<8x512xf32>
    %151 = tpu.matmul %148, %150, %cst_65 {dimension_numbers = #tpu.dot_dimension_numbers<[1], [0], [0], [1], [0, 0, 1, 1], [], []>} : vector<8x128xf32>, vector<128x512xf32>, vector<8x512xf32> -> vector<8x512xf32>
    %152 = arith.addf %149, %151 : vector<8x512xf32>
    %153 = vector.extract_strided_slice %152 {offsets = [0, 0], sizes = [8, 128], strides = [1, 1]} : vector<8x512xf32> to vector<8x128xf32>
    %cst_66 = arith.constant 5.000000e-01 : f32
    %154 = vector.broadcast %cst_66 : f32 to vector<8x128xf32>
    %155 = arith.mulf %154, %153 : vector<8x128xf32>
    %156 = math.tanh %155 : vector<8x128xf32>
    %cst_67 = arith.constant 5.000000e-01 : f32
    %157 = vector.broadcast %cst_67 : f32 to vector<8x128xf32>
    %158 = arith.mulf %157, %156 : vector<8x128xf32>
    %cst_68 = arith.constant 5.000000e-01 : f32
    %159 = vector.broadcast %cst_68 : f32 to vector<8x128xf32>
    %160 = arith.addf %158, %159 : vector<8x128xf32>
    %161 = vector.extract_strided_slice %152 {offsets = [0, 128], sizes = [8, 128], strides = [1, 1]} : vector<8x512xf32> to vector<8x128xf32>
    %cst_69 = arith.constant 5.000000e-01 : f32
    %162 = vector.broadcast %cst_69 : f32 to vector<8x128xf32>
    %163 = arith.mulf %162, %161 : vector<8x128xf32>
    %164 = math.tanh %163 : vector<8x128xf32>
    %cst_70 = arith.constant 5.000000e-01 : f32
    %165 = vector.broadcast %cst_70 : f32 to vector<8x128xf32>
    %166 = arith.mulf %165, %164 : vector<8x128xf32>
    %cst_71 = arith.constant 5.000000e-01 : f32
    %167 = vector.broadcast %cst_71 : f32 to vector<8x128xf32>
    %168 = arith.addf %166, %167 : vector<8x128xf32>
    %169 = vector.extract_strided_slice %152 {offsets = [0, 256], sizes = [8, 128], strides = [1, 1]} : vector<8x512xf32> to vector<8x128xf32>
    %170 = math.tanh %169 : vector<8x128xf32>
    %171 = vector.extract_strided_slice %152 {offsets = [0, 384], sizes = [8, 128], strides = [1, 1]} : vector<8x512xf32> to vector<8x128xf32>
    %cst_72 = arith.constant 5.000000e-01 : f32
    %172 = vector.broadcast %cst_72 : f32 to vector<8x128xf32>
    %173 = arith.mulf %172, %171 : vector<8x128xf32>
    %174 = math.tanh %173 : vector<8x128xf32>
    %cst_73 = arith.constant 5.000000e-01 : f32
    %175 = vector.broadcast %cst_73 : f32 to vector<8x128xf32>
    %176 = arith.mulf %175, %174 : vector<8x128xf32>
    %cst_74 = arith.constant 5.000000e-01 : f32
    %177 = vector.broadcast %cst_74 : f32 to vector<8x128xf32>
    %178 = arith.addf %176, %177 : vector<8x128xf32>
    %179 = arith.mulf %168, %146 : vector<8x128xf32>
    %180 = arith.mulf %160, %170 : vector<8x128xf32>
    %181 = arith.addf %179, %180 : vector<8x128xf32>
    %182 = math.tanh %181 : vector<8x128xf32>
    %183 = arith.mulf %178, %182 : vector<8x128xf32>
    %c40 = arith.constant 40 : index
    %c0_75 = arith.constant 0 : index
    %184 = vector.load %arg7[%c40, %c0_75] : memref<64x512xf32, #tpu.memory_space<vmem>>, vector<8x512xf32>
    %c0_76 = arith.constant 0 : index
    %c0_77 = arith.constant 0 : index
    %185 = vector.load %arg2[%c0_76, %c0_77] : memref<128x512xf32, #tpu.memory_space<vmem>>, vector<128x512xf32>
    %cst_78 = arith.constant dense<0.000000e+00> : vector<8x512xf32>
    %186 = tpu.matmul %183, %185, %cst_78 {dimension_numbers = #tpu.dot_dimension_numbers<[1], [0], [0], [1], [0, 0, 1, 1], [], []>} : vector<8x128xf32>, vector<128x512xf32>, vector<8x512xf32> -> vector<8x512xf32>
    %187 = arith.addf %184, %186 : vector<8x512xf32>
    %188 = vector.extract_strided_slice %187 {offsets = [0, 0], sizes = [8, 128], strides = [1, 1]} : vector<8x512xf32> to vector<8x128xf32>
    %cst_79 = arith.constant 5.000000e-01 : f32
    %189 = vector.broadcast %cst_79 : f32 to vector<8x128xf32>
    %190 = arith.mulf %189, %188 : vector<8x128xf32>
    %191 = math.tanh %190 : vector<8x128xf32>
    %cst_80 = arith.constant 5.000000e-01 : f32
    %192 = vector.broadcast %cst_80 : f32 to vector<8x128xf32>
    %193 = arith.mulf %192, %191 : vector<8x128xf32>
    %cst_81 = arith.constant 5.000000e-01 : f32
    %194 = vector.broadcast %cst_81 : f32 to vector<8x128xf32>
    %195 = arith.addf %193, %194 : vector<8x128xf32>
    %196 = vector.extract_strided_slice %187 {offsets = [0, 128], sizes = [8, 128], strides = [1, 1]} : vector<8x512xf32> to vector<8x128xf32>
    %cst_82 = arith.constant 5.000000e-01 : f32
    %197 = vector.broadcast %cst_82 : f32 to vector<8x128xf32>
    %198 = arith.mulf %197, %196 : vector<8x128xf32>
    %199 = math.tanh %198 : vector<8x128xf32>
    %cst_83 = arith.constant 5.000000e-01 : f32
    %200 = vector.broadcast %cst_83 : f32 to vector<8x128xf32>
    %201 = arith.mulf %200, %199 : vector<8x128xf32>
    %cst_84 = arith.constant 5.000000e-01 : f32
    %202 = vector.broadcast %cst_84 : f32 to vector<8x128xf32>
    %203 = arith.addf %201, %202 : vector<8x128xf32>
    %204 = vector.extract_strided_slice %187 {offsets = [0, 256], sizes = [8, 128], strides = [1, 1]} : vector<8x512xf32> to vector<8x128xf32>
    %205 = math.tanh %204 : vector<8x128xf32>
    %206 = vector.extract_strided_slice %187 {offsets = [0, 384], sizes = [8, 128], strides = [1, 1]} : vector<8x512xf32> to vector<8x128xf32>
    %cst_85 = arith.constant 5.000000e-01 : f32
    %207 = vector.broadcast %cst_85 : f32 to vector<8x128xf32>
    %208 = arith.mulf %207, %206 : vector<8x128xf32>
    %209 = math.tanh %208 : vector<8x128xf32>
    %cst_86 = arith.constant 5.000000e-01 : f32
    %210 = vector.broadcast %cst_86 : f32 to vector<8x128xf32>
    %211 = arith.mulf %210, %209 : vector<8x128xf32>
    %cst_87 = arith.constant 5.000000e-01 : f32
    %212 = vector.broadcast %cst_87 : f32 to vector<8x128xf32>
    %213 = arith.addf %211, %212 : vector<8x128xf32>
    %214 = arith.mulf %203, %181 : vector<8x128xf32>
    %215 = arith.mulf %195, %205 : vector<8x128xf32>
    %216 = arith.addf %214, %215 : vector<8x128xf32>
    %217 = math.tanh %216 : vector<8x128xf32>
    %218 = arith.mulf %213, %217 : vector<8x128xf32>
    %c48 = arith.constant 48 : index
    %c0_88 = arith.constant 0 : index
    %219 = vector.load %arg7[%c48, %c0_88] : memref<64x512xf32, #tpu.memory_space<vmem>>, vector<8x512xf32>
    %c0_89 = arith.constant 0 : index
    %c0_90 = arith.constant 0 : index
    %220 = vector.load %arg2[%c0_89, %c0_90] : memref<128x512xf32, #tpu.memory_space<vmem>>, vector<128x512xf32>
    %cst_91 = arith.constant dense<0.000000e+00> : vector<8x512xf32>
    %221 = tpu.matmul %218, %220, %cst_91 {dimension_numbers = #tpu.dot_dimension_numbers<[1], [0], [0], [1], [0, 0, 1, 1], [], []>} : vector<8x128xf32>, vector<128x512xf32>, vector<8x512xf32> -> vector<8x512xf32>
    %222 = arith.addf %219, %221 : vector<8x512xf32>
    %223 = vector.extract_strided_slice %222 {offsets = [0, 0], sizes = [8, 128], strides = [1, 1]} : vector<8x512xf32> to vector<8x128xf32>
    %cst_92 = arith.constant 5.000000e-01 : f32
    %224 = vector.broadcast %cst_92 : f32 to vector<8x128xf32>
    %225 = arith.mulf %224, %223 : vector<8x128xf32>
    %226 = math.tanh %225 : vector<8x128xf32>
    %cst_93 = arith.constant 5.000000e-01 : f32
    %227 = vector.broadcast %cst_93 : f32 to vector<8x128xf32>
    %228 = arith.mulf %227, %226 : vector<8x128xf32>
    %cst_94 = arith.constant 5.000000e-01 : f32
    %229 = vector.broadcast %cst_94 : f32 to vector<8x128xf32>
    %230 = arith.addf %228, %229 : vector<8x128xf32>
    %231 = vector.extract_strided_slice %222 {offsets = [0, 128], sizes = [8, 128], strides = [1, 1]} : vector<8x512xf32> to vector<8x128xf32>
    %cst_95 = arith.constant 5.000000e-01 : f32
    %232 = vector.broadcast %cst_95 : f32 to vector<8x128xf32>
    %233 = arith.mulf %232, %231 : vector<8x128xf32>
    %234 = math.tanh %233 : vector<8x128xf32>
    %cst_96 = arith.constant 5.000000e-01 : f32
    %235 = vector.broadcast %cst_96 : f32 to vector<8x128xf32>
    %236 = arith.mulf %235, %234 : vector<8x128xf32>
    %cst_97 = arith.constant 5.000000e-01 : f32
    %237 = vector.broadcast %cst_97 : f32 to vector<8x128xf32>
    %238 = arith.addf %236, %237 : vector<8x128xf32>
    %239 = vector.extract_strided_slice %222 {offsets = [0, 256], sizes = [8, 128], strides = [1, 1]} : vector<8x512xf32> to vector<8x128xf32>
    %240 = math.tanh %239 : vector<8x128xf32>
    %241 = vector.extract_strided_slice %222 {offsets = [0, 384], sizes = [8, 128], strides = [1, 1]} : vector<8x512xf32> to vector<8x128xf32>
    %cst_98 = arith.constant 5.000000e-01 : f32
    %242 = vector.broadcast %cst_98 : f32 to vector<8x128xf32>
    %243 = arith.mulf %242, %241 : vector<8x128xf32>
    %244 = math.tanh %243 : vector<8x128xf32>
    %cst_99 = arith.constant 5.000000e-01 : f32
    %245 = vector.broadcast %cst_99 : f32 to vector<8x128xf32>
    %246 = arith.mulf %245, %244 : vector<8x128xf32>
    %cst_100 = arith.constant 5.000000e-01 : f32
    %247 = vector.broadcast %cst_100 : f32 to vector<8x128xf32>
    %248 = arith.addf %246, %247 : vector<8x128xf32>
    %249 = arith.mulf %238, %216 : vector<8x128xf32>
    %250 = arith.mulf %230, %240 : vector<8x128xf32>
    %251 = arith.addf %249, %250 : vector<8x128xf32>
    %252 = math.tanh %251 : vector<8x128xf32>
    %253 = arith.mulf %248, %252 : vector<8x128xf32>
    %c56 = arith.constant 56 : index
    %c0_101 = arith.constant 0 : index
    %254 = vector.load %arg7[%c56, %c0_101] : memref<64x512xf32, #tpu.memory_space<vmem>>, vector<8x512xf32>
    %c0_102 = arith.constant 0 : index
    %c0_103 = arith.constant 0 : index
    %255 = vector.load %arg2[%c0_102, %c0_103] : memref<128x512xf32, #tpu.memory_space<vmem>>, vector<128x512xf32>
    %cst_104 = arith.constant dense<0.000000e+00> : vector<8x512xf32>
    %256 = tpu.matmul %253, %255, %cst_104 {dimension_numbers = #tpu.dot_dimension_numbers<[1], [0], [0], [1], [0, 0, 1, 1], [], []>} : vector<8x128xf32>, vector<128x512xf32>, vector<8x512xf32> -> vector<8x512xf32>
    %257 = arith.addf %254, %256 : vector<8x512xf32>
    %258 = vector.extract_strided_slice %257 {offsets = [0, 0], sizes = [8, 128], strides = [1, 1]} : vector<8x512xf32> to vector<8x128xf32>
    %cst_105 = arith.constant 5.000000e-01 : f32
    %259 = vector.broadcast %cst_105 : f32 to vector<8x128xf32>
    %260 = arith.mulf %259, %258 : vector<8x128xf32>
    %261 = math.tanh %260 : vector<8x128xf32>
    %cst_106 = arith.constant 5.000000e-01 : f32
    %262 = vector.broadcast %cst_106 : f32 to vector<8x128xf32>
    %263 = arith.mulf %262, %261 : vector<8x128xf32>
    %cst_107 = arith.constant 5.000000e-01 : f32
    %264 = vector.broadcast %cst_107 : f32 to vector<8x128xf32>
    %265 = arith.addf %263, %264 : vector<8x128xf32>
    %266 = vector.extract_strided_slice %257 {offsets = [0, 128], sizes = [8, 128], strides = [1, 1]} : vector<8x512xf32> to vector<8x128xf32>
    %cst_108 = arith.constant 5.000000e-01 : f32
    %267 = vector.broadcast %cst_108 : f32 to vector<8x128xf32>
    %268 = arith.mulf %267, %266 : vector<8x128xf32>
    %269 = math.tanh %268 : vector<8x128xf32>
    %cst_109 = arith.constant 5.000000e-01 : f32
    %270 = vector.broadcast %cst_109 : f32 to vector<8x128xf32>
    %271 = arith.mulf %270, %269 : vector<8x128xf32>
    %cst_110 = arith.constant 5.000000e-01 : f32
    %272 = vector.broadcast %cst_110 : f32 to vector<8x128xf32>
    %273 = arith.addf %271, %272 : vector<8x128xf32>
    %274 = vector.extract_strided_slice %257 {offsets = [0, 256], sizes = [8, 128], strides = [1, 1]} : vector<8x512xf32> to vector<8x128xf32>
    %275 = math.tanh %274 : vector<8x128xf32>
    %276 = vector.extract_strided_slice %257 {offsets = [0, 384], sizes = [8, 128], strides = [1, 1]} : vector<8x512xf32> to vector<8x128xf32>
    %cst_111 = arith.constant 5.000000e-01 : f32
    %277 = vector.broadcast %cst_111 : f32 to vector<8x128xf32>
    %278 = arith.mulf %277, %276 : vector<8x128xf32>
    %279 = math.tanh %278 : vector<8x128xf32>
    %cst_112 = arith.constant 5.000000e-01 : f32
    %280 = vector.broadcast %cst_112 : f32 to vector<8x128xf32>
    %281 = arith.mulf %280, %279 : vector<8x128xf32>
    %cst_113 = arith.constant 5.000000e-01 : f32
    %282 = vector.broadcast %cst_113 : f32 to vector<8x128xf32>
    %283 = arith.addf %281, %282 : vector<8x128xf32>
    %284 = arith.mulf %273, %251 : vector<8x128xf32>
    %285 = arith.mulf %265, %275 : vector<8x128xf32>
    %286 = arith.addf %284, %285 : vector<8x128xf32>
    %287 = math.tanh %286 : vector<8x128xf32>
    %288 = arith.mulf %283, %287 : vector<8x128xf32>
    %c0_114 = arith.constant 0 : index
    %c0_115 = arith.constant 0 : index
    %289 = vector.load %arg4[%c0_114, %c0_115] : memref<1x128xf32, #tpu.memory_space<vmem>>, vector<1x128xf32>
    %290 = vector.broadcast %289 : vector<1x128xf32> to vector<8x128xf32>
    %291 = arith.mulf %288, %290 : vector<8x128xf32>
    %cst_116 = arith.constant dense<0.000000e+00> : vector<8xf32>
    %292 = vector.multi_reduction <add>, %291, %cst_116 [1] : vector<8x128xf32> to vector<8xf32>
    %293 = vector.shape_cast %292 : vector<8xf32> to vector<8x1xf32>
    %c0_117 = arith.constant 0 : index
    %c0_118 = arith.constant 0 : index
    %294 = vector.load %arg5[%c0_117, %c0_118] : memref<1x1xf32, #tpu.memory_space<vmem>>, vector<1x1xf32>
    %295 = vector.broadcast %294 : vector<1x1xf32> to vector<8x1xf32>
    %296 = arith.addf %293, %295 : vector<8x1xf32>
    %c0_119 = arith.constant 0 : index
    %c0_120 = arith.constant 0 : index
    %297 = vector.load %arg6[%c0_119, %c0_120] : memref<8x1xf32, #tpu.memory_space<vmem>>, vector<8x1xf32>
    tpu.vector_store %arg6[%c0_119, %c0_120], %296 {strides = array<i32>} : memref<8x1xf32, #tpu.memory_space<vmem>>, vector<8x1xf32>,
    return
  }
}

</mosaic_0001>

<llo_original>
// kernel: tpu_custom_call.1
$region0: #{tpu_custom_call.1}
  #allocation0 [shape = 'u32[]', space=smem, size = 0x4, offset = 0x4, fixed_abs, tag = 'smem constant byte address 0x4 - core index']
  #allocation1 [shape = 'u32[144,128]{1,0:T(1,128)}', space=vmem, size = 0x12000, scoped, tag = 'internal scratch']
  #allocation2 [shape = 'f32[64,512]{1,0:T(8,128)}', space=vmem, size = 0x20000, scoped, tag = 'scratch operand']
  #allocation3 [shape = 'f32[1,1]{1,0:T(1,128)S(1)}', space=vmem, size = 0x200, scoped, tag = 'scoped memory for tpu_custom_call.1']
  %s0 = inlined_call_operand.vmem [shape: f32[64,4], index: 0, kind: input, shape index: {}]
  %s1 = inlined_call_operand.vmem [shape: f32[4,512], index: 1, kind: input, shape index: {}]
  %s2 = inlined_call_operand.hbm [shape: f32[128,512], index: 2, kind: input, shape index: {}]
  %s3 = inlined_call_operand.vmem [shape: f32[1,512], index: 3, kind: input, shape index: {}]
  %s4 = inlined_call_operand.vmem [shape: f32[1,128], index: 4, kind: input, shape index: {}]
  %s5 = inlined_call_operand.<no memory space> [shape: f32[1,1], index: 5, kind: input, shape index: {}]
  %s6 = inlined_call_operand.vmem [shape: f32[8,1], index: 6, kind: output, shape index: {}]
  %s7 = sld [smem:[#allocation0]]
  $region38: #{tpu_custom_call.1} parent=0
    _
  %s9 = ssub.s32 1, %s7
  %s10 = scalar_select 0, %s9, %s7
  %v11 = vstv %s5
  %12 = vst [vmem:[#allocation3] sm:$0x1] %v11
  $region1: #{tpu_custom_call.1} parent=0
    #allocation4 [shape = 'u8[262144]{0}', space=vmem, size = 0x40000, scoped, tag = 'input window, operand 2, single buffered']
    #allocation5 [shape = 's32[1]{0}', space=sflag, size = 0x4, scoped, tag = 'scoped memory for tpu_custom_call.1']
    %13 = vsyncpa [#allocation5], 0
    // Predicated region
    $region2: #{tpu_custom_call.1} parent=1 // pred_check
      _
    $region3: #{tpu_custom_call.1} parent=1 // pred_check_branch
      %15 = sbr.rel (0) target = $region5
    $region4: #{tpu_custom_call.1} parent=1 // pred_region
      _
    $region5: #{tpu_custom_call.1} parent=1 // pred_fallthru
      _
    // Predicated region
    $region6: #{tpu_custom_call.1} parent=1 // pred_check
      _
    $region7: #{tpu_custom_call.1} parent=1 // pred_check_branch
      %17 = sbr.rel (0) target = $region9
    $region8: #{tpu_custom_call.1} parent=1 // pred_region
      _
    $region9: #{tpu_custom_call.1} parent=1 // pred_fallthru
      _
    // Predicated region
    $region10: #{tpu_custom_call.1} parent=1 // pred_check
      _
    $region11: #{tpu_custom_call.1} parent=1 // pred_check_branch
      %19 = sbr.rel (0) target = $region13
    $region12: #{tpu_custom_call.1} parent=1 // pred_region
      %s21 = ssub.s32 8192, 8192
      %22 = vsyncadd [#allocation5], %s21
      %s23 = sshll.u32 [#allocation4], 4
      %s24 = int_to_ptr.vmem [resolvable:$true] %s23
      %29 = dma.hbm_to_vmem [thread:$0]  %s2, 8192, %s24, [#allocation5], 512, 512, 32
    $region13: #{tpu_custom_call.1} parent=1 // pred_fallthru
      _
    // Predicated region
    $region14: #{tpu_custom_call.1} parent=1 // pred_check
      _
    $region15: #{tpu_custom_call.1} parent=1 // pred_check_branch
      %31 = sbr.rel (0) target = $region17
    $region16: #{tpu_custom_call.1} parent=1 // pred_region
      _
    $region17: #{tpu_custom_call.1} parent=1 // pred_fallthru
      _
    // Predicated region
    $region18: #{tpu_custom_call.1} parent=1 // pred_check
      _
    $region19: #{tpu_custom_call.1} parent=1 // pred_check_branch
      %33 = sbr.rel (0) target = $region21
    $region20: #{tpu_custom_call.1} parent=1 // pred_region
      _
    $region21: #{tpu_custom_call.1} parent=1 // pred_fallthru
      _
    // Predicated region
    $region22: #{tpu_custom_call.1} parent=1 // pred_check
      _
    $region23: #{tpu_custom_call.1} parent=1 // pred_check_branch
      %35 = sbr.rel (0) target = $region25
    $region24: #{tpu_custom_call.1} parent=1 // pred_region
      _
    $region25: #{tpu_custom_call.1} parent=1 // pred_fallthru
      _
    // Predicated region
    $region26: #{tpu_custom_call.1} parent=1 // pred_check
      _
    $region27: #{tpu_custom_call.1} parent=1 // pred_check_branch
      %37 = sbr.rel (0) target = $region29
    $region28: #{tpu_custom_call.1} parent=1 // pred_region
      %38 = dma.done [#allocation5], 8192
    $region29: #{tpu_custom_call.1} parent=1 // pred_fallthru
      _
    %v39 = vld [vmem:[%s0] sm:$0xff]
    %v40 = vld [vmem:[%s0 + $0x8] sm:$0xff]
    %v41 = vld [vmem:[%s0 + $0x10] sm:$0xff]
    %v42 = vld [vmem:[%s0 + $0x18] sm:$0xff]
    %v43 = vld [vmem:[%s0 + $0x20] sm:$0xff]
    %v44 = vld [vmem:[%s0 + $0x28] sm:$0xff]
    %v45 = vld [vmem:[%s0 + $0x30] sm:$0xff]
    %v46 = vld [vmem:[%s0 + $0x38] sm:$0xff]
    %v47 = vld [vmem:[%s1] sm:$0xff]
    %v48 = vld [vmem:[%s1 + $0x8] sm:$0xff]
    %v49 = vld [vmem:[%s3] sm:$0xf]
    %v51 = vlaneseq
    %v52 = vshrl.u32 %v51, 7
    %v53 = vsub.s32 0, %v52
    %v54 = vrot.slane %v49, %v53
    %v55 = vlaneseq
    %v56 = vshrl.u32 %v55, 7
    %v57 = vsub.s32 1, %v56
    %v58 = vrot.slane %v49, %v57
    %v59 = vlaneseq
    %v60 = vshrl.u32 %v59, 7
    %v61 = vsub.s32 2, %v60
    %v62 = vrot.slane %v49, %v61
    %v63 = vlaneseq
    %v64 = vshrl.u32 %v63, 7
    %v65 = vsub.s32 3, %v64
    %v66 = vrot.slane %v49, %v65
    %v73 = vcombine.high %v47, %v47
    %v74 = vcombine.high %v48, %v48
    %vm75 = vcmask 31744
    %v77 = vsel %vm75, %v39, 0
    %v80 = vsel %vm75, %v40, 0
    %v83 = vsel %vm75, %v41, 0
    %v86 = vsel %vm75, %v42, 0
    %v89 = vsel %vm75, %v43, 0
    %v92 = vsel %vm75, %v44, 0
    %v95 = vsel %vm75, %v45, 0
    %v98 = vsel %vm75, %v46, 0
    %vm100 = vcmask 1043456
    %v101 = vsel %vm100, %v47, 0
    %v103 = vsel %vm100, %v73, 0
    %v105 = vsel %vm100, %v48, 0
    %v107 = vsel %vm100, %v74, 0
    %109 = vmatprep.subr.mxu0 0.0
    %110 = vmatpush1.msra.mxu0 0.0
    %111 = vmatprep.subr.mxu0 0.0
    %112 = vmatpush1.msra.mxu0 0.0
    %113 = vmatprep.subr.mxu0 0.0
    %114 = vmatpush1.msra.mxu0 0.0
    %115 = vmatprep.subr.mxu0 0.0
    %116 = vmatpush1.msra.mxu0 0.0
    %117 = vmatprep.subr.mxu0 0.0
    %118 = vmatpush1.msra.mxu0 0.0
    %119 = vmatprep.subr.mxu0 0.0
    %120 = vmatpush1.msra.mxu0 0.0
    %121 = vmatprep.subr.mxu0 0.0
    %122 = vmatpush1.msra.mxu0 0.0
    %123 = vmatprep.subr.mxu0 0.0
    %124 = vmatpush1.msra.mxu0 0.0
    %125 = vmatprep.subr.mxu0 0.0
    %126 = vmatpush1.msra.mxu0 0.0
    %127 = vmatprep.subr.mxu0 0.0
    %128 = vmatpush1.msra.mxu0 0.0
    %129 = vmatprep.subr.mxu0 0.0
    %130 = vmatpush1.msra.mxu0 0.0
    %131 = vmatprep.subr.mxu0 0.0
    %132 = vmatpush1.msra.mxu0 0.0
    %133 = vmatprep.subr.mxu0 0.0
    %134 = vmatpush1.msra.mxu0 0.0
    %135 = vmatprep.subr.mxu0 0.0
    %136 = vmatpush1.msra.mxu0 0.0
    %137 = vmatprep.subr.mxu0 0.0
    %138 = vmatpush1.msra.mxu0 0.0
    %139 = vmatprep.subr.mxu0 %v103
    %140 = vmatpush1.msra.mxu0 %v101
    %141 = vmatprep.subr.mxu0 0.0
    %142 = vmatpush2.msra.mxu0 0.0
    %143 = vmatprep.subr.mxu0 0.0
    %144 = vmatpush2.msra.mxu0 0.0
    %145 = vmatprep.subr.mxu0 0.0
    %146 = vmatpush2.msra.mxu0 0.0
    %147 = vmatprep.subr.mxu0 0.0
    %148 = vmatpush2.msra.mxu0 0.0
    %149 = vmatprep.subr.mxu0 0.0
    %150 = vmatpush2.msra.mxu0 0.0
    %151 = vmatprep.subr.mxu0 0.0
    %152 = vmatpush2.msra.mxu0 0.0
    %153 = vmatprep.subr.mxu0 0.0
    %154 = vmatpush2.msra.mxu0 0.0
    %155 = vmatprep.subr.mxu0 0.0
    %156 = vmatpush2.msra.mxu0 0.0
    %157 = vmatprep.subr.mxu0 0.0
    %158 = vmatpush2.msra.mxu0 0.0
    %159 = vmatprep.subr.mxu0 0.0
    %160 = vmatpush2.msra.mxu0 0.0
    %161 = vmatprep.subr.mxu0 0.0
    %162 = vmatpush2.msra.mxu0 0.0
    %163 = vmatprep.subr.mxu0 0.0
    %164 = vmatpush2.msra.mxu0 0.0
    %165 = vmatprep.subr.mxu0 0.0
    %166 = vmatpush2.msra.mxu0 0.0
    %167 = vmatprep.subr.mxu0 0.0
    %168 = vmatpush2.msra.mxu0 0.0
    %169 = vmatprep.subr.mxu0 0.0
    %170 = vmatpush2.msra.mxu0 0.0
    %171 = vmatprep.subr.mxu0 0.0
    %172 = vmatpush2.msra.mxu0 0.0
    %173 = vmatprep.mubr.f32.mxu0 0.0
    %174 = vmatmul.mubr.f32.gmra.mxu0 %v77
    %v175 = vpop.f32.mrf.mxu0
    %v176 = vadd.f32 %v54, %v175
    %v177 = vpop.f32.mrf.mxu0
    %v178 = vadd.f32 %v58, %v177
    %179 = vmatprep.mubr.f32.mxu0 0.0
    %180 = vmatmul.mubr.f32.gmra.mxu0 %v80
    %v181 = vpop.f32.mrf.mxu0
    %v182 = vadd.f32 %v54, %v181
    %v183 = vpop.f32.mrf.mxu0
    %v184 = vadd.f32 %v58, %v183
    %185 = vmatprep.mubr.f32.mxu0 0.0
    %186 = vmatmul.mubr.f32.gmra.mxu0 %v83
    %v187 = vpop.f32.mrf.mxu0
    %v188 = vadd.f32 %v54, %v187
    %v189 = vpop.f32.mrf.mxu0
    %v190 = vadd.f32 %v58, %v189
    %191 = vmatprep.mubr.f32.mxu0 0.0
    %192 = vmatmul.mubr.f32.gmra.mxu0 %v86
    %v193 = vpop.f32.mrf.mxu0
    %v194 = vadd.f32 %v54, %v193
    %v195 = vpop.f32.mrf.mxu0
    %v196 = vadd.f32 %v58, %v195
    %197 = vmatprep.mubr.f32.mxu0 0.0
    %198 = vmatmul.mubr.f32.gmra.mxu0 %v89
    %v199 = vpop.f32.mrf.mxu0
    %v200 = vadd.f32 %v54, %v199
    %v201 = vpop.f32.mrf.mxu0
    %v202 = vadd.f32 %v58, %v201
    %203 = vmatprep.mubr.f32.mxu0 0.0
    %204 = vmatmul.mubr.f32.gmra.mxu0 %v92
    %v205 = vpop.f32.mrf.mxu0
    %v206 = vadd.f32 %v54, %v205
    %v207 = vpop.f32.mrf.mxu0
    %v208 = vadd.f32 %v58, %v207
    %209 = vmatprep.mubr.f32.mxu0 0.0
    %210 = vmatmul.mubr.f32.gmra.mxu0 %v95
    %v211 = vpop.f32.mrf.mxu0
    %v212 = vadd.f32 %v54, %v211
    %v213 = vpop.f32.mrf.mxu0
    %v214 = vadd.f32 %v58, %v213
    %215 = vmatprep.mubr.f32.mxu0 0.0
    %216 = vmatmul.mubr.f32.gmra.mxu0 %v98
    %v217 = vpop.f32.mrf.mxu0
    %v218 = vadd.f32 %v54, %v217
    %v219 = vpop.f32.mrf.mxu0
    %v220 = vadd.f32 %v58, %v219
    %221 = vdwg.mxu0
    %222 = vmatprep.subr.mxu0 0.0
    %223 = vmatpush1.msra.mxu0 0.0
    %224 = vmatprep.subr.mxu0 0.0
    %225 = vmatpush1.msra.mxu0 0.0
    %226 = vmatprep.subr.mxu0 0.0
    %227 = vmatpush1.msra.mxu0 0.0
    %228 = vmatprep.subr.mxu0 0.0
    %229 = vmatpush1.msra.mxu0 0.0
    %230 = vmatprep.subr.mxu0 0.0
    %231 = vmatpush1.msra.mxu0 0.0
    %232 = vmatprep.subr.mxu0 0.0
    %233 = vmatpush1.msra.mxu0 0.0
    %234 = vmatprep.subr.mxu0 0.0
    %235 = vmatpush1.msra.mxu0 0.0
    %236 = vmatprep.subr.mxu0 0.0
    %237 = vmatpush1.msra.mxu0 0.0
    %238 = vmatprep.subr.mxu0 0.0
    %239 = vmatpush1.msra.mxu0 0.0
    %240 = vmatprep.subr.mxu0 0.0
    %241 = vmatpush1.msra.mxu0 0.0
    %242 = vmatprep.subr.mxu0 0.0
    %243 = vmatpush1.msra.mxu0 0.0
    %244 = vmatprep.subr.mxu0 0.0
    %245 = vmatpush1.msra.mxu0 0.0
    %246 = vmatprep.subr.mxu0 0.0
    %247 = vmatpush1.msra.mxu0 0.0
    %248 = vmatprep.subr.mxu0 0.0
    %249 = vmatpush1.msra.mxu0 0.0
    %250 = vmatprep.subr.mxu0 0.0
    %251 = vmatpush1.msra.mxu0 0.0
    %252 = vmatprep.subr.mxu0 %v107
    %253 = vmatpush1.msra.mxu0 %v105
    %254 = vmatprep.subr.mxu0 0.0
    %255 = vmatpush2.msra.mxu0 0.0
    %256 = vmatprep.subr.mxu0 0.0
    %257 = vmatpush2.msra.mxu0 0.0
    %258 = vmatprep.subr.mxu0 0.0
    %259 = vmatpush2.msra.mxu0 0.0
    %260 = vmatprep.subr.mxu0 0.0
    %261 = vmatpush2.msra.mxu0 0.0
    %262 = vmatprep.subr.mxu0 0.0
    %263 = vmatpush2.msra.mxu0 0.0
    %264 = vmatprep.subr.mxu0 0.0
    %265 = vmatpush2.msra.mxu0 0.0
    %266 = vmatprep.subr.mxu0 0.0
    %267 = vmatpush2.msra.mxu0 0.0
    %268 = vmatprep.subr.mxu0 0.0
    %269 = vmatpush2.msra.mxu0 0.0
    %270 = vmatprep.subr.mxu0 0.0
    %271 = vmatpush2.msra.mxu0 0.0
    %272 = vmatprep.subr.mxu0 0.0
    %273 = vmatpush2.msra.mxu0 0.0
    %274 = vmatprep.subr.mxu0 0.0
    %275 = vmatpush2.msra.mxu0 0.0
    %276 = vmatprep.subr.mxu0 0.0
    %277 = vmatpush2.msra.mxu0 0.0
    %278 = vmatprep.subr.mxu0 0.0
    %279 = vmatpush2.msra.mxu0 0.0
    %280 = vmatprep.subr.mxu0 0.0
    %281 = vmatpush2.msra.mxu0 0.0
    %282 = vmatprep.subr.mxu0 0.0
    %283 = vmatpush2.msra.mxu0 0.0
    %284 = vmatprep.subr.mxu0 0.0
    %285 = vmatpush2.msra.mxu0 0.0
    %286 = vmatprep.mubr.f32.mxu0 0.0
    %287 = vmatmul.mubr.f32.gmra.mxu0 %v77
    %v288 = vpop.f32.mrf.mxu0
    %v289 = vadd.f32 %v62, %v288
    %v290 = vpop.f32.mrf.mxu0
    %v291 = vadd.f32 %v66, %v290
    %292 = vmatprep.mubr.f32.mxu0 0.0
    %293 = vmatmul.mubr.f32.gmra.mxu0 %v80
    %v294 = vpop.f32.mrf.mxu0
    %v295 = vadd.f32 %v62, %v294
    %v296 = vpop.f32.mrf.mxu0
    %v297 = vadd.f32 %v66, %v296
    %298 = vmatprep.mubr.f32.mxu0 0.0
    %299 = vmatmul.mubr.f32.gmra.mxu0 %v83
    %v300 = vpop.f32.mrf.mxu0
    %v301 = vadd.f32 %v62, %v300
    %v302 = vpop.f32.mrf.mxu0
    %v303 = vadd.f32 %v66, %v302
    %304 = vmatprep.mubr.f32.mxu0 0.0
    %305 = vmatmul.mubr.f32.gmra.mxu0 %v86
    %v306 = vpop.f32.mrf.mxu0
    %v307 = vadd.f32 %v62, %v306
    %v308 = vpop.f32.mrf.mxu0
    %v309 = vadd.f32 %v66, %v308
    %310 = vmatprep.mubr.f32.mxu0 0.0
    %311 = vmatmul.mubr.f32.gmra.mxu0 %v89
    %v312 = vpop.f32.mrf.mxu0
    %v313 = vadd.f32 %v62, %v312
    %v314 = vpop.f32.mrf.mxu0
    %v315 = vadd.f32 %v66, %v314
    %316 = vmatprep.mubr.f32.mxu0 0.0
    %317 = vmatmul.mubr.f32.gmra.mxu0 %v92
    %v318 = vpop.f32.mrf.mxu0
    %v319 = vadd.f32 %v62, %v318
    %v320 = vpop.f32.mrf.mxu0
    %v321 = vadd.f32 %v66, %v320
    %322 = vmatprep.mubr.f32.mxu0 0.0
    %323 = vmatmul.mubr.f32.gmra.mxu0 %v95
    %v324 = vpop.f32.mrf.mxu0
    %v325 = vadd.f32 %v62, %v324
    %v326 = vpop.f32.mrf.mxu0
    %v327 = vadd.f32 %v66, %v326
    %328 = vmatprep.mubr.f32.mxu0 0.0
    %329 = vmatmul.mubr.f32.gmra.mxu0 %v98
    %v330 = vpop.f32.mrf.mxu0
    %v331 = vadd.f32 %v62, %v330
    %v332 = vpop.f32.mrf.mxu0
    %v333 = vadd.f32 %v66, %v332
    %334 = vdwg.mxu0
    %335 = vst [vmem:[#allocation2] sm:$0xff] %v176
    %336 = vst [vmem:[#allocation2 + $0x8] sm:$0xff] %v178
    %337 = vst [vmem:[#allocation2 + $0x10] sm:$0xff] %v289
    %338 = vst [vmem:[#allocation2 + $0x18] sm:$0xff] %v291
    %339 = vst [vmem:[#allocation2 + $0x20] sm:$0xff] %v182
    %340 = vst [vmem:[#allocation2 + $0x28] sm:$0xff] %v184
    %341 = vst [vmem:[#allocation2 + $0x30] sm:$0xff] %v295
    %342 = vst [vmem:[#allocation2 + $0x38] sm:$0xff] %v297
    %343 = vst [vmem:[#allocation2 + $0x40] sm:$0xff] %v188
    %344 = vst [vmem:[#allocation2 + $0x48] sm:$0xff] %v190
    %345 = vst [vmem:[#allocation2 + $0x50] sm:$0xff] %v301
    %346 = vst [vmem:[#allocation2 + $0x58] sm:$0xff] %v303
    %347 = vst [vmem:[#allocation2 + $0x60] sm:$0xff] %v194
    %348 = vst [vmem:[#allocation2 + $0x68] sm:$0xff] %v196
    %349 = vst [vmem:[#allocation2 + $0x70] sm:$0xff] %v307
    %350 = vst [vmem:[#allocation2 + $0x78] sm:$0xff] %v309
    %351 = vst [vmem:[#allocation2 + $0x80] sm:$0xff] %v200
    %352 = vst [vmem:[#allocation2 + $0x88] sm:$0xff] %v202
    %353 = vst [vmem:[#allocation2 + $0x90] sm:$0xff] %v313
    %354 = vst [vmem:[#allocation2 + $0x98] sm:$0xff] %v315
    %355 = vst [vmem:[#allocation2 + $0xa0] sm:$0xff] %v206
    %356 = vst [vmem:[#allocation2 + $0xa8] sm:$0xff] %v208
    %357 = vst [vmem:[#allocation2 + $0xb0] sm:$0xff] %v319
    %358 = vst [vmem:[#allocation2 + $0xb8] sm:$0xff] %v321
    %359 = vst [vmem:[#allocation2 + $0xc0] sm:$0xff] %v212
    %360 = vst [vmem:[#allocation2 + $0xc8] sm:$0xff] %v214
    %361 = vst [vmem:[#allocation2 + $0xd0] sm:$0xff] %v325
    %362 = vst [vmem:[#allocation2 + $0xd8] sm:$0xff] %v327
    %363 = vst [vmem:[#allocation2 + $0xe0] sm:$0xff] %v218
    %364 = vst [vmem:[#allocation2 + $0xe8] sm:$0xff] %v220
    %365 = vst [vmem:[#allocation2 + $0xf0] sm:$0xff] %v331
    %366 = vst [vmem:[#allocation2 + $0xf8] sm:$0xff] %v333
    %v367 = vld [vmem:[#allocation2] sm:$0xff]
    %v368 = vld [vmem:[#allocation2 + $0x8] sm:$0xff]
    %v369 = vld [vmem:[#allocation2 + $0x10] sm:$0xff]
    %v370 = vld [vmem:[#allocation2 + $0x18] sm:$0xff]
    %v371 = vld [vmem:[#allocation4] sm:$0xff]
    %v372 = vld [vmem:[#allocation4 + $0x8] sm:$0xff]
    %v373 = vld [vmem:[#allocation4 + $0x10] sm:$0xff]
    %v374 = vld [vmem:[#allocation4 + $0x18] sm:$0xff]
    %v375 = vld [vmem:[#allocation4 + $0x20] sm:$0xff]
    %v376 = vld [vmem:[#allocation4 + $0x28] sm:$0xff]
    %v377 = vld [vmem:[#allocation4 + $0x30] sm:$0xff]
    %v378 = vld [vmem:[#allocation4 + $0x38] sm:$0xff]
    %v379 = vld [vmem:[#allocation4 + $0x40] sm:$0xff]
    %v380 = vld [vmem:[#allocation4 + $0x48] sm:$0xff]
    %v381 = vld [vmem:[#allocation4 + $0x50] sm:$0xff]
    %v382 = vld [vmem:[#allocation4 + $0x58] sm:$0xff]
    %v383 = vld [vmem:[#allocation4 + $0x60] sm:$0xff]
    %v384 = vld [vmem:[#allocation4 + $0x68] sm:$0xff]
    %v385 = vld [vmem:[#allocation4 + $0x70] sm:$0xff]
    %v386 = vld [vmem:[#allocation4 + $0x78] sm:$0xff]
    %v387 = vld [vmem:[#allocation4 + $0x80] sm:$0xff]
    %v388 = vld [vmem:[#allocation4 + $0x88] sm:$0xff]
    %v389 = vld [vmem:[#allocation4 + $0x90] sm:$0xff]
    %v390 = vld [vmem:[#allocation4 + $0x98] sm:$0xff]
    %v391 = vld [vmem:[#allocation4 + $0xa0] sm:$0xff]
    %v392 = vld [vmem:[#allocation4 + $0xa8] sm:$0xff]
    %v393 = vld [vmem:[#allocation4 + $0xb0] sm:$0xff]
    %v394 = vld [vmem:[#allocation4 + $0xb8] sm:$0xff]
    %v395 = vld [vmem:[#allocation4 + $0xc0] sm:$0xff]
    %v396 = vld [vmem:[#allocation4 + $0xc8] sm:$0xff]
    %v397 = vld [vmem:[#allocation4 + $0xd0] sm:$0xff]
    %v398 = vld [vmem:[#allocation4 + $0xd8] sm:$0xff]
    %v399 = vld [vmem:[#allocation4 + $0xe0] sm:$0xff]
    %v400 = vld [vmem:[#allocation4 + $0xe8] sm:$0xff]
    %v401 = vld [vmem:[#allocation4 + $0xf0] sm:$0xff]
    %v402 = vld [vmem:[#allocation4 + $0xf8] sm:$0xff]
    %v403 = vld [vmem:[#allocation4 + $0x100] sm:$0xff]
    %v404 = vld [vmem:[#allocation4 + $0x108] sm:$0xff]
    %v405 = vld [vmem:[#allocation4 + $0x110] sm:$0xff]
    %v406 = vld [vmem:[#allocation4 + $0x118] sm:$0xff]
    %v407 = vld [vmem:[#allocation4 + $0x120] sm:$0xff]
    %v408 = vld [vmem:[#allocation4 + $0x128] sm:$0xff]
    %v409 = vld [vmem:[#allocation4 + $0x130] sm:$0xff]
    %v410 = vld [vmem:[#allocation4 + $0x138] sm:$0xff]
    %v411 = vld [vmem:[#allocation4 + $0x140] sm:$0xff]
    %v412 = vld [vmem:[#allocation4 + $0x148] sm:$0xff]
    %v413 = vld [vmem:[#allocation4 + $0x150] sm:$0xff]
    %v414 = vld [vmem:[#allocation4 + $0x158] sm:$0xff]
    %v415 = vld [vmem:[#allocation4 + $0x160] sm:$0xff]
    %v416 = vld [vmem:[#allocation4 + $0x168] sm:$0xff]
    %v417 = vld [vmem:[#allocation4 + $0x170] sm:$0xff]
    %v418 = vld [vmem:[#allocation4 + $0x178] sm:$0xff]
    %v419 = vld [vmem:[#allocation4 + $0x180] sm:$0xff]
    %v420 = vld [vmem:[#allocation4 + $0x188] sm:$0xff]
    %v421 = vld [vmem:[#allocation4 + $0x190] sm:$0xff]
    %v422 = vld [vmem:[#allocation4 + $0x198] sm:$0xff]
    %v423 = vld [vmem:[#allocation4 + $0x1a0] sm:$0xff]
    %v424 = vld [vmem:[#allocation4 + $0x1a8] sm:$0xff]
    %v425 = vld [vmem:[#allocation4 + $0x1b0] sm:$0xff]
    %v426 = vld [vmem:[#allocation4 + $0x1b8] sm:$0xff]
    %v427 = vld [vmem:[#allocation4 + $0x1c0] sm:$0xff]
    %v428 = vld [vmem:[#allocation4 + $0x1c8] sm:$0xff]
    %v429 = vld [vmem:[#allocation4 + $0x1d0] sm:$0xff]
    %v430 = vld [vmem:[#allocation4 + $0x1d8] sm:$0xff]
    %v431 = vld [vmem:[#allocation4 + $0x1e0] sm:$0xff]
    %v432 = vld [vmem:[#allocation4 + $0x1e8] sm:$0xff]
    %v433 = vld [vmem:[#allocation4 + $0x1f0] sm:$0xff]
    %v434 = vld [vmem:[#allocation4 + $0x1f8] sm:$0xff]
    %435 = vmatprep.subr.mxu0 %v432
    %436 = vmatpush1.msra.mxu0 %v431
    %437 = vmatprep.subr.mxu0 %v428
    %438 = vmatpush1.msra.mxu0 %v427
    %439 = vmatprep.subr.mxu0 %v424
    %440 = vmatpush1.msra.mxu0 %v423
    %441 = vmatprep.subr.mxu0 %v420
    %442 = vmatpush1.msra.mxu0 %v419
    %443 = vmatprep.subr.mxu0 %v416
    %444 = vmatpush1.msra.mxu0 %v415
    %445 = vmatprep.subr.mxu0 %v412
    %446 = vmatpush1.msra.mxu0 %v411
    %447 = vmatprep.subr.mxu0 %v408
    %448 = vmatpush1.msra.mxu0 %v407
    %449 = vmatprep.subr.mxu0 %v404
    %450 = vmatpush1.msra.mxu0 %v403
    %451 = vmatprep.subr.mxu0 %v400
    %452 = vmatpush1.msra.mxu0 %v399
    %453 = vmatprep.subr.mxu0 %v396
    %454 = vmatpush1.msra.mxu0 %v395
    %455 = vmatprep.subr.mxu0 %v392
    %456 = vmatpush1.msra.mxu0 %v391
    %457 = vmatprep.subr.mxu0 %v388
    %458 = vmatpush1.msra.mxu0 %v387
    %459 = vmatprep.subr.mxu0 %v384
    %460 = vmatpush1.msra.mxu0 %v383
    %461 = vmatprep.subr.mxu0 %v380
    %462 = vmatpush1.msra.mxu0 %v379
    %463 = vmatprep.subr.mxu0 %v376
    %464 = vmatpush1.msra.mxu0 %v375
    %465 = vmatprep.subr.mxu0 %v372
    %466 = vmatpush1.msra.mxu0 %v371
    %467 = vmatprep.subr.mxu0 0.0
    %468 = vmatpush2.msra.mxu0 0.0
    %469 = vmatprep.subr.mxu0 0.0
    %470 = vmatpush2.msra.mxu0 0.0
    %471 = vmatprep.subr.mxu0 0.0
    %472 = vmatpush2.msra.mxu0 0.0
    %473 = vmatprep.subr.mxu0 0.0
    %474 = vmatpush2.msra.mxu0 0.0
    %475 = vmatprep.subr.mxu0 0.0
    %476 = vmatpush2.msra.mxu0 0.0
    %477 = vmatprep.subr.mxu0 0.0
    %478 = vmatpush2.msra.mxu0 0.0
    %479 = vmatprep.subr.mxu0 0.0
    %480 = vmatpush2.msra.mxu0 0.0
    %481 = vmatprep.subr.mxu0 0.0
    %482 = vmatpush2.msra.mxu0 0.0
    %483 = vmatprep.subr.mxu0 0.0
    %484 = vmatpush2.msra.mxu0 0.0
    %485 = vmatprep.subr.mxu0 0.0
    %486 = vmatpush2.msra.mxu0 0.0
    %487 = vmatprep.subr.mxu0 0.0
    %488 = vmatpush2.msra.mxu0 0.0
    %489 = vmatprep.subr.mxu0 0.0
    %490 = vmatpush2.msra.mxu0 0.0
    %491 = vmatprep.subr.mxu0 0.0
    %492 = vmatpush2.msra.mxu0 0.0
    %493 = vmatprep.subr.mxu0 0.0
    %494 = vmatpush2.msra.mxu0 0.0
    %495 = vmatprep.subr.mxu0 0.0
    %496 = vmatpush2.msra.mxu0 0.0
    %497 = vmatprep.subr.mxu0 0.0
    %498 = vmatpush2.msra.mxu0 0.0
    %499 = vmatprep.mubr.f32.mxu0 0.0
    %500 = vmatmul.mubr.f32.gmra.mxu0 0.0
    %v501 = vpop.f32.mrf.mxu0
    %v502 = vadd.f32 0.0, %v501
    %v503 = vpop.f32.mrf.mxu0
    %v504 = vadd.f32 0.0, %v503
    %505 = vdwg.mxu0
    %506 = vmatprep.subr.mxu0 %v434
    %507 = vmatpush1.msra.mxu0 %v433
    %508 = vmatprep.subr.mxu0 %v430
    %509 = vmatpush1.msra.mxu0 %v429
    %510 = vmatprep.subr.mxu0 %v426
    %511 = vmatpush1.msra.mxu0 %v425
    %512 = vmatprep.subr.mxu0 %v422
    %513 = vmatpush1.msra.mxu0 %v421
    %514 = vmatprep.subr.mxu0 %v418
    %515 = vmatpush1.msra.mxu0 %v417
    %516 = vmatprep.subr.mxu0 %v414
    %517 = vmatpush1.msra.mxu0 %v413
    %518 = vmatprep.subr.mxu0 %v410
    %519 = vmatpush1.msra.mxu0 %v409
    %520 = vmatprep.subr.mxu0 %v406
    %521 = vmatpush1.msra.mxu0 %v405
    %522 = vmatprep.subr.mxu0 %v402
    %523 = vmatpush1.msra.mxu0 %v401
    %524 = vmatprep.subr.mxu0 %v398
    %525 = vmatpush1.msra.mxu0 %v397
    %526 = vmatprep.subr.mxu0 %v394
    %527 = vmatpush1.msra.mxu0 %v393
    %528 = vmatprep.subr.mxu0 %v390
    %529 = vmatpush1.msra.mxu0 %v389
    %530 = vmatprep.subr.mxu0 %v386
    %531 = vmatpush1.msra.mxu0 %v385
    %532 = vmatprep.subr.mxu0 %v382
    %533 = vmatpush1.msra.mxu0 %v381
    %534 = vmatprep.subr.mxu0 %v378
    %535 = vmatpush1.msra.mxu0 %v377
    %536 = vmatprep.subr.mxu0 %v374
    %537 = vmatpush1.msra.mxu0 %v373
    %538 = vmatprep.subr.mxu0 0.0
    %539 = vmatpush2.msra.mxu0 0.0
    %540 = vmatprep.subr.mxu0 0.0
    %541 = vmatpush2.msra.mxu0 0.0
    %542 = vmatprep.subr.mxu0 0.0
    %543 = vmatpush2.msra.mxu0 0.0
    %544 = vmatprep.subr.mxu0 0.0
    %545 = vmatpush2.msra.mxu0 0.0
    %546 = vmatprep.subr.mxu0 0.0
    %547 = vmatpush2.msra.mxu0 0.0
    %548 = vmatprep.subr.mxu0 0.0
    %549 = vmatpush2.msra.mxu0 0.0
    %550 = vmatprep.subr.mxu0 0.0
    %551 = vmatpush2.msra.mxu0 0.0
    %552 = vmatprep.subr.mxu0 0.0
    %553 = vmatpush2.msra.mxu0 0.0
    %554 = vmatprep.subr.mxu0 0.0
    %555 = vmatpush2.msra.mxu0 0.0
    %556 = vmatprep.subr.mxu0 0.0
    %557 = vmatpush2.msra.mxu0 0.0
    %558 = vmatprep.subr.mxu0 0.0
    %559 = vmatpush2.msra.mxu0 0.0
    %560 = vmatprep.subr.mxu0 0.0
    %561 = vmatpush2.msra.mxu0 0.0
    %562 = vmatprep.subr.mxu0 0.0
    %563 = vmatpush2.msra.mxu0 0.0
    %564 = vmatprep.subr.mxu0 0.0
    %565 = vmatpush2.msra.mxu0 0.0
    %566 = vmatprep.subr.mxu0 0.0
    %567 = vmatpush2.msra.mxu0 0.0
    %568 = vmatprep.subr.mxu0 0.0
    %569 = vmatpush2.msra.mxu0 0.0
    %570 = vmatprep.mubr.f32.mxu0 0.0
    %571 = vmatmul.mubr.f32.gmra.mxu0 0.0
    %v572 = vpop.f32.mrf.mxu0
    %v573 = vadd.f32 0.0, %v572
    %v574 = vpop.f32.mrf.mxu0
    %v575 = vadd.f32 0.0, %v574
    %576 = vdwg.mxu0
    %v577 = vadd.f32 %v367, %v502
    %v578 = vadd.f32 %v368, %v504
    %v579 = vadd.f32 %v369, %v573
    %v580 = vadd.f32 %v370, %v575
    %v581 = vmul.f32 %v577, 0.5
    %v582 = vtanh.pop %v581
    %v583 = vmul.f32 %v582, 0.5
    %v584 = vadd.f32 %v583, 0.5
    %v585 = vmul.f32 %v578, 0.5
    %v586 = vtanh.pop %v585
    %v587 = vmul.f32 %v586, 0.5
    %v588 = vadd.f32 %v587, 0.5
    %v589 = vtanh.pop %v579
    %v590 = vmul.f32 %v580, 0.5
    %v591 = vtanh.pop %v590
    %v592 = vmul.f32 %v591, 0.5
    %v593 = vadd.f32 %v592, 0.5
    %v594 = vmul.f32 %v588, 0.0
    %v595 = vmul.f32 %v584, %v589
    %v596 = vadd.f32 %v594, %v595
    %v597 = vtanh.pop %v596
    %v598 = vmul.f32 %v593, %v597
    %v599 = vld [vmem:[#allocation2 + $0x20] sm:$0xff]
    %v600 = vld [vmem:[#allocation2 + $0x28] sm:$0xff]
    %v601 = vld [vmem:[#allocation2 + $0x30] sm:$0xff]
    %v602 = vld [vmem:[#allocation2 + $0x38] sm:$0xff]
    %603 = vmatprep.subr.mxu0 %v432
    %604 = vmatpush1.msra.mxu0 %v431
    %605 = vmatprep.subr.mxu0 %v428
    %606 = vmatpush1.msra.mxu0 %v427
    %607 = vmatprep.subr.mxu0 %v424
    %608 = vmatpush1.msra.mxu0 %v423
    %609 = vmatprep.subr.mxu0 %v420
    %610 = vmatpush1.msra.mxu0 %v419
    %611 = vmatprep.subr.mxu0 %v416
    %612 = vmatpush1.msra.mxu0 %v415
    %613 = vmatprep.subr.mxu0 %v412
    %614 = vmatpush1.msra.mxu0 %v411
    %615 = vmatprep.subr.mxu0 %v408
    %616 = vmatpush1.msra.mxu0 %v407
    %617 = vmatprep.subr.mxu0 %v404
    %618 = vmatpush1.msra.mxu0 %v403
    %619 = vmatprep.subr.mxu0 %v400
    %620 = vmatpush1.msra.mxu0 %v399
    %621 = vmatprep.subr.mxu0 %v396
    %622 = vmatpush1.msra.mxu0 %v395
    %623 = vmatprep.subr.mxu0 %v392
    %624 = vmatpush1.msra.mxu0 %v391
    %625 = vmatprep.subr.mxu0 %v388
    %626 = vmatpush1.msra.mxu0 %v387
    %627 = vmatprep.subr.mxu0 %v384
    %628 = vmatpush1.msra.mxu0 %v383
    %629 = vmatprep.subr.mxu0 %v380
    %630 = vmatpush1.msra.mxu0 %v379
    %631 = vmatprep.subr.mxu0 %v376
    %632 = vmatpush1.msra.mxu0 %v375
    %633 = vmatprep.subr.mxu0 %v372
    %634 = vmatpush1.msra.mxu0 %v371
    %635 = vmatprep.subr.mxu0 0.0
    %636 = vmatpush2.msra.mxu0 0.0
    %637 = vmatprep.subr.mxu0 0.0
    %638 = vmatpush2.msra.mxu0 0.0
    %639 = vmatprep.subr.mxu0 0.0
    %640 = vmatpush2.msra.mxu0 0.0
    %641 = vmatprep.subr.mxu0 0.0
    %642 = vmatpush2.msra.mxu0 0.0
    %643 = vmatprep.subr.mxu0 0.0
    %644 = vmatpush2.msra.mxu0 0.0
    %645 = vmatprep.subr.mxu0 0.0
    %646 = vmatpush2.msra.mxu0 0.0
    %647 = vmatprep.subr.mxu0 0.0
    %648 = vmatpush2.msra.mxu0 0.0
    %649 = vmatprep.subr.mxu0 0.0
    %650 = vmatpush2.msra.mxu0 0.0
    %651 = vmatprep.subr.mxu0 0.0
    %652 = vmatpush2.msra.mxu0 0.0
    %653 = vmatprep.subr.mxu0 0.0
    %654 = vmatpush2.msra.mxu0 0.0
    %655 = vmatprep.subr.mxu0 0.0
    %656 = vmatpush2.msra.mxu0 0.0
    %657 = vmatprep.subr.mxu0 0.0
    %658 = vmatpush2.msra.mxu0 0.0
    %659 = vmatprep.subr.mxu0 0.0
    %660 = vmatpush2.msra.mxu0 0.0
    %661 = vmatprep.subr.mxu0 0.0
    %662 = vmatpush2.msra.mxu0 0.0
    %663 = vmatprep.subr.mxu0 0.0
    %664 = vmatpush2.msra.mxu0 0.0
    %665 = vmatprep.subr.mxu0 0.0
    %666 = vmatpush2.msra.mxu0 0.0
    %667 = vmatprep.mubr.f32.mxu0 0.0
    %668 = vmatmul.mubr.f32.gmra.mxu0 %v598
    %v669 = vpop.f32.mrf.mxu0
    %v670 = vadd.f32 0.0, %v669
    %v671 = vpop.f32.mrf.mxu0
    %v672 = vadd.f32 0.0, %v671
    %673 = vdwg.mxu0
    %674 = vmatprep.subr.mxu0 %v434
    %675 = vmatpush1.msra.mxu0 %v433
    %676 = vmatprep.subr.mxu0 %v430
    %677 = vmatpush1.msra.mxu0 %v429
    %678 = vmatprep.subr.mxu0 %v426
    %679 = vmatpush1.msra.mxu0 %v425
    %680 = vmatprep.subr.mxu0 %v422
    %681 = vmatpush1.msra.mxu0 %v421
    %682 = vmatprep.subr.mxu0 %v418
    %683 = vmatpush1.msra.mxu0 %v417
    %684 = vmatprep.subr.mxu0 %v414
    %685 = vmatpush1.msra.mxu0 %v413
    %686 = vmatprep.subr.mxu0 %v410
    %687 = vmatpush1.msra.mxu0 %v409
    %688 = vmatprep.subr.mxu0 %v406
    %689 = vmatpush1.msra.mxu0 %v405
    %690 = vmatprep.subr.mxu0 %v402
    %691 = vmatpush1.msra.mxu0 %v401
    %692 = vmatprep.subr.mxu0 %v398
    %693 = vmatpush1.msra.mxu0 %v397
    %694 = vmatprep.subr.mxu0 %v394
    %695 = vmatpush1.msra.mxu0 %v393
    %696 = vmatprep.subr.mxu0 %v390
    %697 = vmatpush1.msra.mxu0 %v389
    %698 = vmatprep.subr.mxu0 %v386
    %699 = vmatpush1.msra.mxu0 %v385
    %700 = vmatprep.subr.mxu0 %v382
    %701 = vmatpush1.msra.mxu0 %v381
    %702 = vmatprep.subr.mxu0 %v378
    %703 = vmatpush1.msra.mxu0 %v377
    %704 = vmatprep.subr.mxu0 %v374
    %705 = vmatpush1.msra.mxu0 %v373
    %706 = vmatprep.subr.mxu0 0.0
    %707 = vmatpush2.msra.mxu0 0.0
    %708 = vmatprep.subr.mxu0 0.0
    %709 = vmatpush2.msra.mxu0 0.0
    %710 = vmatprep.subr.mxu0 0.0
    %711 = vmatpush2.msra.mxu0 0.0
    %712 = vmatprep.subr.mxu0 0.0
    %713 = vmatpush2.msra.mxu0 0.0
    %714 = vmatprep.subr.mxu0 0.0
    %715 = vmatpush2.msra.mxu0 0.0
    %716 = vmatprep.subr.mxu0 0.0
    %717 = vmatpush2.msra.mxu0 0.0
    %718 = vmatprep.subr.mxu0 0.0
    %719 = vmatpush2.msra.mxu0 0.0
    %720 = vmatprep.subr.mxu0 0.0
    %721 = vmatpush2.msra.mxu0 0.0
    %722 = vmatprep.subr.mxu0 0.0
    %723 = vmatpush2.msra.mxu0 0.0
    %724 = vmatprep.subr.mxu0 0.0
    %725 = vmatpush2.msra.mxu0 0.0
    %726 = vmatprep.subr.mxu0 0.0
    %727 = vmatpush2.msra.mxu0 0.0
    %728 = vmatprep.subr.mxu0 0.0
    %729 = vmatpush2.msra.mxu0 0.0
    %730 = vmatprep.subr.mxu0 0.0
    %731 = vmatpush2.msra.mxu0 0.0
    %732 = vmatprep.subr.mxu0 0.0
    %733 = vmatpush2.msra.mxu0 0.0
    %734 = vmatprep.subr.mxu0 0.0
    %735 = vmatpush2.msra.mxu0 0.0
    %736 = vmatprep.subr.mxu0 0.0
    %737 = vmatpush2.msra.mxu0 0.0
    %738 = vmatprep.mubr.f32.mxu0 0.0
    %739 = vmatmul.mubr.f32.gmra.mxu0 %v598
    %v740 = vpop.f32.mrf.mxu0
    %v741 = vadd.f32 0.0, %v740
    %v742 = vpop.f32.mrf.mxu0
    %v743 = vadd.f32 0.0, %v742
    %744 = vdwg.mxu0
    %v745 = vadd.f32 %v599, %v670
    %v746 = vadd.f32 %v600, %v672
    %v747 = vadd.f32 %v601, %v741
    %v748 = vadd.f32 %v602, %v743
    %v749 = vmul.f32 %v745, 0.5
    %v750 = vtanh.pop %v749
    %v751 = vmul.f32 %v750, 0.5
    %v752 = vadd.f32 %v751, 0.5
    %v753 = vmul.f32 %v746, 0.5
    %v754 = vtanh.pop %v753
    %v755 = vmul.f32 %v754, 0.5
    %v756 = vadd.f32 %v755, 0.5
    %v757 = vtanh.pop %v747
    %v758 = vmul.f32 %v748, 0.5
    %v759 = vtanh.pop %v758
    %v760 = vmul.f32 %v759, 0.5
    %v761 = vadd.f32 %v760, 0.5
    %v762 = vmul.f32 %v756, %v596
    %v763 = vmul.f32 %v752, %v757
    %v764 = vadd.f32 %v762, %v763
    %v765 = vtanh.pop %v764
    %v766 = vmul.f32 %v761, %v765
    %v767 = vld [vmem:[#allocation2 + $0x40] sm:$0xff]
    %v768 = vld [vmem:[#allocation2 + $0x48] sm:$0xff]
    %v769 = vld [vmem:[#allocation2 + $0x50] sm:$0xff]
    %v770 = vld [vmem:[#allocation2 + $0x58] sm:$0xff]
    %771 = vmatprep.subr.mxu0 %v432
    %772 = vmatpush1.msra.mxu0 %v431
    %773 = vmatprep.subr.mxu0 %v428
    %774 = vmatpush1.msra.mxu0 %v427
    %775 = vmatprep.subr.mxu0 %v424
    %776 = vmatpush1.msra.mxu0 %v423
    %777 = vmatprep.subr.mxu0 %v420
    %778 = vmatpush1.msra.mxu0 %v419
    %779 = vmatprep.subr.mxu0 %v416
    %780 = vmatpush1.msra.mxu0 %v415
    %781 = vmatprep.subr.mxu0 %v412
    %782 = vmatpush1.msra.mxu0 %v411
    %783 = vmatprep.subr.mxu0 %v408
    %784 = vmatpush1.msra.mxu0 %v407
    %785 = vmatprep.subr.mxu0 %v404
    %786 = vmatpush1.msra.mxu0 %v403
    %787 = vmatprep.subr.mxu0 %v400
    %788 = vmatpush1.msra.mxu0 %v399
    %789 = vmatprep.subr.mxu0 %v396
    %790 = vmatpush1.msra.mxu0 %v395
    %791 = vmatprep.subr.mxu0 %v392
    %792 = vmatpush1.msra.mxu0 %v391
    %793 = vmatprep.subr.mxu0 %v388
    %794 = vmatpush1.msra.mxu0 %v387
    %795 = vmatprep.subr.mxu0 %v384
    %796 = vmatpush1.msra.mxu0 %v383
    %797 = vmatprep.subr.mxu0 %v380
    %798 = vmatpush1.msra.mxu0 %v379
    %799 = vmatprep.subr.mxu0 %v376
    %800 = vmatpush1.msra.mxu0 %v375
    %801 = vmatprep.subr.mxu0 %v372
    %802 = vmatpush1.msra.mxu0 %v371
    %803 = vmatprep.subr.mxu0 0.0
    %804 = vmatpush2.msra.mxu0 0.0
    %805 = vmatprep.subr.mxu0 0.0
    %806 = vmatpush2.msra.mxu0 0.0
    %807 = vmatprep.subr.mxu0 0.0
    %808 = vmatpush2.msra.mxu0 0.0
    %809 = vmatprep.subr.mxu0 0.0
    %810 = vmatpush2.msra.mxu0 0.0
    %811 = vmatprep.subr.mxu0 0.0
    %812 = vmatpush2.msra.mxu0 0.0
    %813 = vmatprep.subr.mxu0 0.0
    %814 = vmatpush2.msra.mxu0 0.0
    %815 = vmatprep.subr.mxu0 0.0
    %816 = vmatpush2.msra.mxu0 0.0
    %817 = vmatprep.subr.mxu0 0.0
    %818 = vmatpush2.msra.mxu0 0.0
    %819 = vmatprep.subr.mxu0 0.0
    %820 = vmatpush2.msra.mxu0 0.0
    %821 = vmatprep.subr.mxu0 0.0
    %822 = vmatpush2.msra.mxu0 0.0
    %823 = vmatprep.subr.mxu0 0.0
    %824 = vmatpush2.msra.mxu0 0.0
    %825 = vmatprep.subr.mxu0 0.0
    %826 = vmatpush2.msra.mxu0 0.0
    %827 = vmatprep.subr.mxu0 0.0
    %828 = vmatpush2.msra.mxu0 0.0
    %829 = vmatprep.subr.mxu0 0.0
    %830 = vmatpush2.msra.mxu0 0.0
    %831 = vmatprep.subr.mxu0 0.0
    %832 = vmatpush2.msra.mxu0 0.0
    %833 = vmatprep.subr.mxu0 0.0
    %834 = vmatpush2.msra.mxu0 0.0
    %835 = vmatprep.mubr.f32.mxu0 0.0
    %836 = vmatmul.mubr.f32.gmra.mxu0 %v766
    %v837 = vpop.f32.mrf.mxu0
    %v838 = vadd.f32 0.0, %v837
    %v839 = vpop.f32.mrf.mxu0
    %v840 = vadd.f32 0.0, %v839
    %841 = vdwg.mxu0
    %842 = vmatprep.subr.mxu0 %v434
    %843 = vmatpush1.msra.mxu0 %v433
    %844 = vmatprep.subr.mxu0 %v430
    %845 = vmatpush1.msra.mxu0 %v429
    %846 = vmatprep.subr.mxu0 %v426
    %847 = vmatpush1.msra.mxu0 %v425
    %848 = vmatprep.subr.mxu0 %v422
    %849 = vmatpush1.msra.mxu0 %v421
    %850 = vmatprep.subr.mxu0 %v418
    %851 = vmatpush1.msra.mxu0 %v417
    %852 = vmatprep.subr.mxu0 %v414
    %853 = vmatpush1.msra.mxu0 %v413
    %854 = vmatprep.subr.mxu0 %v410
    %855 = vmatpush1.msra.mxu0 %v409
    %856 = vmatprep.subr.mxu0 %v406
    %857 = vmatpush1.msra.mxu0 %v405
    %858 = vmatprep.subr.mxu0 %v402
    %859 = vmatpush1.msra.mxu0 %v401
    %860 = vmatprep.subr.mxu0 %v398
    %861 = vmatpush1.msra.mxu0 %v397
    %862 = vmatprep.subr.mxu0 %v394
    %863 = vmatpush1.msra.mxu0 %v393
    %864 = vmatprep.subr.mxu0 %v390
    %865 = vmatpush1.msra.mxu0 %v389
    %866 = vmatprep.subr.mxu0 %v386
    %867 = vmatpush1.msra.mxu0 %v385
    %868 = vmatprep.subr.mxu0 %v382
    %869 = vmatpush1.msra.mxu0 %v381
    %870 = vmatprep.subr.mxu0 %v378
    %871 = vmatpush1.msra.mxu0 %v377
    %872 = vmatprep.subr.mxu0 %v374
    %873 = vmatpush1.msra.mxu0 %v373
    %874 = vmatprep.subr.mxu0 0.0
    %875 = vmatpush2.msra.mxu0 0.0
    %876 = vmatprep.subr.mxu0 0.0
    %877 = vmatpush2.msra.mxu0 0.0
    %878 = vmatprep.subr.mxu0 0.0
    %879 = vmatpush2.msra.mxu0 0.0
    %880 = vmatprep.subr.mxu0 0.0
    %881 = vmatpush2.msra.mxu0 0.0
    %882 = vmatprep.subr.mxu0 0.0
    %883 = vmatpush2.msra.mxu0 0.0
    %884 = vmatprep.subr.mxu0 0.0
    %885 = vmatpush2.msra.mxu0 0.0
    %886 = vmatprep.subr.mxu0 0.0
    %887 = vmatpush2.msra.mxu0 0.0
    %888 = vmatprep.subr.mxu0 0.0
    %889 = vmatpush2.msra.mxu0 0.0
    %890 = vmatprep.subr.mxu0 0.0
    %891 = vmatpush2.msra.mxu0 0.0
    %892 = vmatprep.subr.mxu0 0.0
    %893 = vmatpush2.msra.mxu0 0.0
    %894 = vmatprep.subr.mxu0 0.0
    %895 = vmatpush2.msra.mxu0 0.0
    %896 = vmatprep.subr.mxu0 0.0
    %897 = vmatpush2.msra.mxu0 0.0
    %898 = vmatprep.subr.mxu0 0.0
    %899 = vmatpush2.msra.mxu0 0.0
    %900 = vmatprep.subr.mxu0 0.0
    %901 = vmatpush2.msra.mxu0 0.0
    %902 = vmatprep.subr.mxu0 0.0
    %903 = vmatpush2.msra.mxu0 0.0
    %904 = vmatprep.subr.mxu0 0.0
    %905 = vmatpush2.msra.mxu0 0.0
    %906 = vmatprep.mubr.f32.mxu0 0.0
    %907 = vmatmul.mubr.f32.gmra.mxu0 %v766
    %v908 = vpop.f32.mrf.mxu0
    %v909 = vadd.f32 0.0, %v908
    %v910 = vpop.f32.mrf.mxu0
    %v911 = vadd.f32 0.0, %v910
    %912 = vdwg.mxu0
    %v913 = vadd.f32 %v767, %v838
    %v914 = vadd.f32 %v768, %v840
    %v915 = vadd.f32 %v769, %v909
    %v916 = vadd.f32 %v770, %v911
    %v917 = vmul.f32 %v913, 0.5
    %v918 = vtanh.pop %v917
    %v919 = vmul.f32 %v918, 0.5
    %v920 = vadd.f32 %v919, 0.5
    %v921 = vmul.f32 %v914, 0.5
    %v922 = vtanh.pop %v921
    %v923 = vmul.f32 %v922, 0.5
    %v924 = vadd.f32 %v923, 0.5
    %v925 = vtanh.pop %v915
    %v926 = vmul.f32 %v916, 0.5
    %v927 = vtanh.pop %v926
    %v928 = vmul.f32 %v927, 0.5
    %v929 = vadd.f32 %v928, 0.5
    %v930 = vmul.f32 %v924, %v764
    %v931 = vmul.f32 %v920, %v925
    %v932 = vadd.f32 %v930, %v931
    %v933 = vtanh.pop %v932
    %v934 = vmul.f32 %v929, %v933
    %v935 = vld [vmem:[#allocation2 + $0x60] sm:$0xff]
    %v936 = vld [vmem:[#allocation2 + $0x68] sm:$0xff]
    %v937 = vld [vmem:[#allocation2 + $0x70] sm:$0xff]
    %v938 = vld [vmem:[#allocation2 + $0x78] sm:$0xff]
    %939 = vmatprep.subr.mxu0 %v432
    %940 = vmatpush1.msra.mxu0 %v431
    %941 = vmatprep.subr.mxu0 %v428
    %942 = vmatpush1.msra.mxu0 %v427
    %943 = vmatprep.subr.mxu0 %v424
    %944 = vmatpush1.msra.mxu0 %v423
    %945 = vmatprep.subr.mxu0 %v420
    %946 = vmatpush1.msra.mxu0 %v419
    %947 = vmatprep.subr.mxu0 %v416
    %948 = vmatpush1.msra.mxu0 %v415
    %949 = vmatprep.subr.mxu0 %v412
    %950 = vmatpush1.msra.mxu0 %v411
    %951 = vmatprep.subr.mxu0 %v408
    %952 = vmatpush1.msra.mxu0 %v407
    %953 = vmatprep.subr.mxu0 %v404
    %954 = vmatpush1.msra.mxu0 %v403
    %955 = vmatprep.subr.mxu0 %v400
    %956 = vmatpush1.msra.mxu0 %v399
    %957 = vmatprep.subr.mxu0 %v396
    %958 = vmatpush1.msra.mxu0 %v395
    %959 = vmatprep.subr.mxu0 %v392
    %960 = vmatpush1.msra.mxu0 %v391
    %961 = vmatprep.subr.mxu0 %v388
    %962 = vmatpush1.msra.mxu0 %v387
    %963 = vmatprep.subr.mxu0 %v384
    %964 = vmatpush1.msra.mxu0 %v383
    %965 = vmatprep.subr.mxu0 %v380
    %966 = vmatpush1.msra.mxu0 %v379
    %967 = vmatprep.subr.mxu0 %v376
    %968 = vmatpush1.msra.mxu0 %v375
    %969 = vmatprep.subr.mxu0 %v372
    %970 = vmatpush1.msra.mxu0 %v371
    %971 = vmatprep.subr.mxu0 0.0
    %972 = vmatpush2.msra.mxu0 0.0
    %973 = vmatprep.subr.mxu0 0.0
    %974 = vmatpush2.msra.mxu0 0.0
    %975 = vmatprep.subr.mxu0 0.0
    %976 = vmatpush2.msra.mxu0 0.0
    %977 = vmatprep.subr.mxu0 0.0
    %978 = vmatpush2.msra.mxu0 0.0
    %979 = vmatprep.subr.mxu0 0.0
    %980 = vmatpush2.msra.mxu0 0.0
    %981 = vmatprep.subr.mxu0 0.0
    %982 = vmatpush2.msra.mxu0 0.0
    %983 = vmatprep.subr.mxu0 0.0
    %984 = vmatpush2.msra.mxu0 0.0
    %985 = vmatprep.subr.mxu0 0.0
    %986 = vmatpush2.msra.mxu0 0.0
    %987 = vmatprep.subr.mxu0 0.0
    %988 = vmatpush2.msra.mxu0 0.0
    %989 = vmatprep.subr.mxu0 0.0
    %990 = vmatpush2.msra.mxu0 0.0
    %991 = vmatprep.subr.mxu0 0.0
    %992 = vmatpush2.msra.mxu0 0.0
    %993 = vmatprep.subr.mxu0 0.0
    %994 = vmatpush2.msra.mxu0 0.0
    %995 = vmatprep.subr.mxu0 0.0
    %996 = vmatpush2.msra.mxu0 0.0
    %997 = vmatprep.subr.mxu0 0.0
    %998 = vmatpush2.msra.mxu0 0.0
    %999 = vmatprep.subr.mxu0 0.0
    %1000 = vmatpush2.msra.mxu0 0.0
    %1001 = vmatprep.subr.mxu0 0.0
    %1002 = vmatpush2.msra.mxu0 0.0
    %1003 = vmatprep.mubr.f32.mxu0 0.0
    %1004 = vmatmul.mubr.f32.gmra.mxu0 %v934
    %v1005 = vpop.f32.mrf.mxu0
    %v1006 = vadd.f32 0.0, %v1005
    %v1007 = vpop.f32.mrf.mxu0
    %v1008 = vadd.f32 0.0, %v1007
    %1009 = vdwg.mxu0
    %1010 = vmatprep.subr.mxu0 %v434
    %1011 = vmatpush1.msra.mxu0 %v433
    %1012 = vmatprep.subr.mxu0 %v430
    %1013 = vmatpush1.msra.mxu0 %v429
    %1014 = vmatprep.subr.mxu0 %v426
    %1015 = vmatpush1.msra.mxu0 %v425
    %1016 = vmatprep.subr.mxu0 %v422
    %1017 = vmatpush1.msra.mxu0 %v421
    %1018 = vmatprep.subr.mxu0 %v418
    %1019 = vmatpush1.msra.mxu0 %v417
    %1020 = vmatprep.subr.mxu0 %v414
    %1021 = vmatpush1.msra.mxu0 %v413
    %1022 = vmatprep.subr.mxu0 %v410
    %1023 = vmatpush1.msra.mxu0 %v409
    %1024 = vmatprep.subr.mxu0 %v406
    %1025 = vmatpush1.msra.mxu0 %v405
    %1026 = vmatprep.subr.mxu0 %v402
    %1027 = vmatpush1.msra.mxu0 %v401
    %1028 = vmatprep.subr.mxu0 %v398
    %1029 = vmatpush1.msra.mxu0 %v397
    %1030 = vmatprep.subr.mxu0 %v394
    %1031 = vmatpush1.msra.mxu0 %v393
    %1032 = vmatprep.subr.mxu0 %v390
    %1033 = vmatpush1.msra.mxu0 %v389
    %1034 = vmatprep.subr.mxu0 %v386
    %1035 = vmatpush1.msra.mxu0 %v385
    %1036 = vmatprep.subr.mxu0 %v382
    %1037 = vmatpush1.msra.mxu0 %v381
    %1038 = vmatprep.subr.mxu0 %v378
    %1039 = vmatpush1.msra.mxu0 %v377
    %1040 = vmatprep.subr.mxu0 %v374
    %1041 = vmatpush1.msra.mxu0 %v373
    %1042 = vmatprep.subr.mxu0 0.0
    %1043 = vmatpush2.msra.mxu0 0.0
    %1044 = vmatprep.subr.mxu0 0.0
    %1045 = vmatpush2.msra.mxu0 0.0
    %1046 = vmatprep.subr.mxu0 0.0
    %1047 = vmatpush2.msra.mxu0 0.0
    %1048 = vmatprep.subr.mxu0 0.0
    %1049 = vmatpush2.msra.mxu0 0.0
    %1050 = vmatprep.subr.mxu0 0.0
    %1051 = vmatpush2.msra.mxu0 0.0
    %1052 = vmatprep.subr.mxu0 0.0
    %1053 = vmatpush2.msra.mxu0 0.0
    %1054 = vmatprep.subr.mxu0 0.0
    %1055 = vmatpush2.msra.mxu0 0.0
    %1056 = vmatprep.subr.mxu0 0.0
    %1057 = vmatpush2.msra.mxu0 0.0
    %1058 = vmatprep.subr.mxu0 0.0
    %1059 = vmatpush2.msra.mxu0 0.0
    %1060 = vmatprep.subr.mxu0 0.0
    %1061 = vmatpush2.msra.mxu0 0.0
    %1062 = vmatprep.subr.mxu0 0.0
    %1063 = vmatpush2.msra.mxu0 0.0
    %1064 = vmatprep.subr.mxu0 0.0
    %1065 = vmatpush2.msra.mxu0 0.0
    %1066 = vmatprep.subr.mxu0 0.0
    %1067 = vmatpush2.msra.mxu0 0.0
    %1068 = vmatprep.subr.mxu0 0.0
    %1069 = vmatpush2.msra.mxu0 0.0
    %1070 = vmatprep.subr.mxu0 0.0
    %1071 = vmatpush2.msra.mxu0 0.0
    %1072 = vmatprep.subr.mxu0 0.0
    %1073 = vmatpush2.msra.mxu0 0.0
    %1074 = vmatprep.mubr.f32.mxu0 0.0
    %1075 = vmatmul.mubr.f32.gmra.mxu0 %v934
    %v1076 = vpop.f32.mrf.mxu0
    %v1077 = vadd.f32 0.0, %v1076
    %v1078 = vpop.f32.mrf.mxu0
    %v1079 = vadd.f32 0.0, %v1078
    %1080 = vdwg.mxu0
    %v1081 = vadd.f32 %v935, %v1006
    %v1082 = vadd.f32 %v936, %v1008
    %v1083 = vadd.f32 %v937, %v1077
    %v1084 = vadd.f32 %v938, %v1079
    %v1085 = vmul.f32 %v1081, 0.5
    %v1086 = vtanh.pop %v1085
    %v1087 = vmul.f32 %v1086, 0.5
    %v1088 = vadd.f32 %v1087, 0.5
    %v1089 = vmul.f32 %v1082, 0.5
    %v1090 = vtanh.pop %v1089
    %v1091 = vmul.f32 %v1090, 0.5
    %v1092 = vadd.f32 %v1091, 0.5
    %v1093 = vtanh.pop %v1083
    %v1094 = vmul.f32 %v1084, 0.5
    %v1095 = vtanh.pop %v1094
    %v1096 = vmul.f32 %v1095, 0.5
    %v1097 = vadd.f32 %v1096, 0.5
    %v1098 = vmul.f32 %v1092, %v932
    %v1099 = vmul.f32 %v1088, %v1093
    %v1100 = vadd.f32 %v1098, %v1099
    %v1101 = vtanh.pop %v1100
    %v1102 = vmul.f32 %v1097, %v1101
    %v1103 = vld [vmem:[#allocation2 + $0x80] sm:$0xff]
    %v1104 = vld [vmem:[#allocation2 + $0x88] sm:$0xff]
    %v1105 = vld [vmem:[#allocation2 + $0x90] sm:$0xff]
    %v1106 = vld [vmem:[#allocation2 + $0x98] sm:$0xff]
    %1107 = vmatprep.subr.mxu0 %v432
    %1108 = vmatpush1.msra.mxu0 %v431
    %1109 = vmatprep.subr.mxu0 %v428
    %1110 = vmatpush1.msra.mxu0 %v427
    %1111 = vmatprep.subr.mxu0 %v424
    %1112 = vmatpush1.msra.mxu0 %v423
    %1113 = vmatprep.subr.mxu0 %v420
    %1114 = vmatpush1.msra.mxu0 %v419
    %1115 = vmatprep.subr.mxu0 %v416
    %1116 = vmatpush1.msra.mxu0 %v415
    %1117 = vmatprep.subr.mxu0 %v412
    %1118 = vmatpush1.msra.mxu0 %v411
    %1119 = vmatprep.subr.mxu0 %v408
    %1120 = vmatpush1.msra.mxu0 %v407
    %1121 = vmatprep.subr.mxu0 %v404
    %1122 = vmatpush1.msra.mxu0 %v403
    %1123 = vmatprep.subr.mxu0 %v400
    %1124 = vmatpush1.msra.mxu0 %v399
    %1125 = vmatprep.subr.mxu0 %v396
    %1126 = vmatpush1.msra.mxu0 %v395
    %1127 = vmatprep.subr.mxu0 %v392
    %1128 = vmatpush1.msra.mxu0 %v391
    %1129 = vmatprep.subr.mxu0 %v388
    %1130 = vmatpush1.msra.mxu0 %v387
    %1131 = vmatprep.subr.mxu0 %v384
    %1132 = vmatpush1.msra.mxu0 %v383
    %1133 = vmatprep.subr.mxu0 %v380
    %1134 = vmatpush1.msra.mxu0 %v379
    %1135 = vmatprep.subr.mxu0 %v376
    %1136 = vmatpush1.msra.mxu0 %v375
    %1137 = vmatprep.subr.mxu0 %v372
    %1138 = vmatpush1.msra.mxu0 %v371
    %1139 = vmatprep.subr.mxu0 0.0
    %1140 = vmatpush2.msra.mxu0 0.0
    %1141 = vmatprep.subr.mxu0 0.0
    %1142 = vmatpush2.msra.mxu0 0.0
    %1143 = vmatprep.subr.mxu0 0.0
    %1144 = vmatpush2.msra.mxu0 0.0
    %1145 = vmatprep.subr.mxu0 0.0
    %1146 = vmatpush2.msra.mxu0 0.0
    %1147 = vmatprep.subr.mxu0 0.0
    %1148 = vmatpush2.msra.mxu0 0.0
    %1149 = vmatprep.subr.mxu0 0.0
    %1150 = vmatpush2.msra.mxu0 0.0
    %1151 = vmatprep.subr.mxu0 0.0
    %1152 = vmatpush2.msra.mxu0 0.0
    %1153 = vmatprep.subr.mxu0 0.0
    %1154 = vmatpush2.msra.mxu0 0.0
    %1155 = vmatprep.subr.mxu0 0.0
    %1156 = vmatpush2.msra.mxu0 0.0
    %1157 = vmatprep.subr.mxu0 0.0
    %1158 = vmatpush2.msra.mxu0 0.0
    %1159 = vmatprep.subr.mxu0 0.0
    %1160 = vmatpush2.msra.mxu0 0.0
    %1161 = vmatprep.subr.mxu0 0.0
    %1162 = vmatpush2.msra.mxu0 0.0
    %1163 = vmatprep.subr.mxu0 0.0
    %1164 = vmatpush2.msra.mxu0 0.0
    %1165 = vmatprep.subr.mxu0 0.0
    %1166 = vmatpush2.msra.mxu0 0.0
    %1167 = vmatprep.subr.mxu0 0.0
    %1168 = vmatpush2.msra.mxu0 0.0
    %1169 = vmatprep.subr.mxu0 0.0
    %1170 = vmatpush2.msra.mxu0 0.0
    %1171 = vmatprep.mubr.f32.mxu0 0.0
    %1172 = vmatmul.mubr.f32.gmra.mxu0 %v1102
    %v1173 = vpop.f32.mrf.mxu0
    %v1174 = vadd.f32 0.0, %v1173
    %v1175 = vpop.f32.mrf.mxu0
    %v1176 = vadd.f32 0.0, %v1175
    %1177 = vdwg.mxu0
    %1178 = vmatprep.subr.mxu0 %v434
    %1179 = vmatpush1.msra.mxu0 %v433
    %1180 = vmatprep.subr.mxu0 %v430
    %1181 = vmatpush1.msra.mxu0 %v429
    %1182 = vmatprep.subr.mxu0 %v426
    %1183 = vmatpush1.msra.mxu0 %v425
    %1184 = vmatprep.subr.mxu0 %v422
    %1185 = vmatpush1.msra.mxu0 %v421
    %1186 = vmatprep.subr.mxu0 %v418
    %1187 = vmatpush1.msra.mxu0 %v417
    %1188 = vmatprep.subr.mxu0 %v414
    %1189 = vmatpush1.msra.mxu0 %v413
    %1190 = vmatprep.subr.mxu0 %v410
    %1191 = vmatpush1.msra.mxu0 %v409
    %1192 = vmatprep.subr.mxu0 %v406
    %1193 = vmatpush1.msra.mxu0 %v405
    %1194 = vmatprep.subr.mxu0 %v402
    %1195 = vmatpush1.msra.mxu0 %v401
    %1196 = vmatprep.subr.mxu0 %v398
    %1197 = vmatpush1.msra.mxu0 %v397
    %1198 = vmatprep.subr.mxu0 %v394
    %1199 = vmatpush1.msra.mxu0 %v393
    %1200 = vmatprep.subr.mxu0 %v390
    %1201 = vmatpush1.msra.mxu0 %v389
    %1202 = vmatprep.subr.mxu0 %v386
    %1203 = vmatpush1.msra.mxu0 %v385
    %1204 = vmatprep.subr.mxu0 %v382
    %1205 = vmatpush1.msra.mxu0 %v381
    %1206 = vmatprep.subr.mxu0 %v378
    %1207 = vmatpush1.msra.mxu0 %v377
    %1208 = vmatprep.subr.mxu0 %v374
    %1209 = vmatpush1.msra.mxu0 %v373
    %1210 = vmatprep.subr.mxu0 0.0
    %1211 = vmatpush2.msra.mxu0 0.0
    %1212 = vmatprep.subr.mxu0 0.0
    %1213 = vmatpush2.msra.mxu0 0.0
    %1214 = vmatprep.subr.mxu0 0.0
    %1215 = vmatpush2.msra.mxu0 0.0
    %1216 = vmatprep.subr.mxu0 0.0
    %1217 = vmatpush2.msra.mxu0 0.0
    %1218 = vmatprep.subr.mxu0 0.0
    %1219 = vmatpush2.msra.mxu0 0.0
    %1220 = vmatprep.subr.mxu0 0.0
    %1221 = vmatpush2.msra.mxu0 0.0
    %1222 = vmatprep.subr.mxu0 0.0
    %1223 = vmatpush2.msra.mxu0 0.0
    %1224 = vmatprep.subr.mxu0 0.0
    %1225 = vmatpush2.msra.mxu0 0.0
    %1226 = vmatprep.subr.mxu0 0.0
    %1227 = vmatpush2.msra.mxu0 0.0
    %1228 = vmatprep.subr.mxu0 0.0
    %1229 = vmatpush2.msra.mxu0 0.0
    %1230 = vmatprep.subr.mxu0 0.0
    %1231 = vmatpush2.msra.mxu0 0.0
    %1232 = vmatprep.subr.mxu0 0.0
    %1233 = vmatpush2.msra.mxu0 0.0
    %1234 = vmatprep.subr.mxu0 0.0
    %1235 = vmatpush2.msra.mxu0 0.0
    %1236 = vmatprep.subr.mxu0 0.0
    %1237 = vmatpush2.msra.mxu0 0.0
    %1238 = vmatprep.subr.mxu0 0.0
    %1239 = vmatpush2.msra.mxu0 0.0
    %1240 = vmatprep.subr.mxu0 0.0
    %1241 = vmatpush2.msra.mxu0 0.0
    %1242 = vmatprep.mubr.f32.mxu0 0.0
    %1243 = vmatmul.mubr.f32.gmra.mxu0 %v1102
    %v1244 = vpop.f32.mrf.mxu0
    %v1245 = vadd.f32 0.0, %v1244
    %v1246 = vpop.f32.mrf.mxu0
    %v1247 = vadd.f32 0.0, %v1246
    %1248 = vdwg.mxu0
    %v1249 = vadd.f32 %v1103, %v1174
    %v1250 = vadd.f32 %v1104, %v1176
    %v1251 = vadd.f32 %v1105, %v1245
    %v1252 = vadd.f32 %v1106, %v1247
    %v1253 = vmul.f32 %v1249, 0.5
    %v1254 = vtanh.pop %v1253
    %v1255 = vmul.f32 %v1254, 0.5
    %v1256 = vadd.f32 %v1255, 0.5
    %v1257 = vmul.f32 %v1250, 0.5
    %v1258 = vtanh.pop %v1257
    %v1259 = vmul.f32 %v1258, 0.5
    %v1260 = vadd.f32 %v1259, 0.5
    %v1261 = vtanh.pop %v1251
    %v1262 = vmul.f32 %v1252, 0.5
    %v1263 = vtanh.pop %v1262
    %v1264 = vmul.f32 %v1263, 0.5
    %v1265 = vadd.f32 %v1264, 0.5
    %v1266 = vmul.f32 %v1260, %v1100
    %v1267 = vmul.f32 %v1256, %v1261
    %v1268 = vadd.f32 %v1266, %v1267
    %v1269 = vtanh.pop %v1268
    %v1270 = vmul.f32 %v1265, %v1269
    %v1271 = vld [vmem:[#allocation2 + $0xa0] sm:$0xff]
    %v1272 = vld [vmem:[#allocation2 + $0xa8] sm:$0xff]
    %v1273 = vld [vmem:[#allocation2 + $0xb0] sm:$0xff]
    %v1274 = vld [vmem:[#allocation2 + $0xb8] sm:$0xff]
    %1275 = vmatprep.subr.mxu0 %v432
    %1276 = vmatpush1.msra.mxu0 %v431
    %1277 = vmatprep.subr.mxu0 %v428
    %1278 = vmatpush1.msra.mxu0 %v427
    %1279 = vmatprep.subr.mxu0 %v424
    %1280 = vmatpush1.msra.mxu0 %v423
    %1281 = vmatprep.subr.mxu0 %v420
    %1282 = vmatpush1.msra.mxu0 %v419
    %1283 = vmatprep.subr.mxu0 %v416
    %1284 = vmatpush1.msra.mxu0 %v415
    %1285 = vmatprep.subr.mxu0 %v412
    %1286 = vmatpush1.msra.mxu0 %v411
    %1287 = vmatprep.subr.mxu0 %v408
    %1288 = vmatpush1.msra.mxu0 %v407
    %1289 = vmatprep.subr.mxu0 %v404
    %1290 = vmatpush1.msra.mxu0 %v403
    %1291 = vmatprep.subr.mxu0 %v400
    %1292 = vmatpush1.msra.mxu0 %v399
    %1293 = vmatprep.subr.mxu0 %v396
    %1294 = vmatpush1.msra.mxu0 %v395
    %1295 = vmatprep.subr.mxu0 %v392
    %1296 = vmatpush1.msra.mxu0 %v391
    %1297 = vmatprep.subr.mxu0 %v388
    %1298 = vmatpush1.msra.mxu0 %v387
    %1299 = vmatprep.subr.mxu0 %v384
    %1300 = vmatpush1.msra.mxu0 %v383
    %1301 = vmatprep.subr.mxu0 %v380
    %1302 = vmatpush1.msra.mxu0 %v379
    %1303 = vmatprep.subr.mxu0 %v376
    %1304 = vmatpush1.msra.mxu0 %v375
    %1305 = vmatprep.subr.mxu0 %v372
    %1306 = vmatpush1.msra.mxu0 %v371
    %1307 = vmatprep.subr.mxu0 0.0
    %1308 = vmatpush2.msra.mxu0 0.0
    %1309 = vmatprep.subr.mxu0 0.0
    %1310 = vmatpush2.msra.mxu0 0.0
    %1311 = vmatprep.subr.mxu0 0.0
    %1312 = vmatpush2.msra.mxu0 0.0
    %1313 = vmatprep.subr.mxu0 0.0
    %1314 = vmatpush2.msra.mxu0 0.0
    %1315 = vmatprep.subr.mxu0 0.0
    %1316 = vmatpush2.msra.mxu0 0.0
    %1317 = vmatprep.subr.mxu0 0.0
    %1318 = vmatpush2.msra.mxu0 0.0
    %1319 = vmatprep.subr.mxu0 0.0
    %1320 = vmatpush2.msra.mxu0 0.0
    %1321 = vmatprep.subr.mxu0 0.0
    %1322 = vmatpush2.msra.mxu0 0.0
    %1323 = vmatprep.subr.mxu0 0.0
    %1324 = vmatpush2.msra.mxu0 0.0
    %1325 = vmatprep.subr.mxu0 0.0
    %1326 = vmatpush2.msra.mxu0 0.0
    %1327 = vmatprep.subr.mxu0 0.0
    %1328 = vmatpush2.msra.mxu0 0.0
    %1329 = vmatprep.subr.mxu0 0.0
    %1330 = vmatpush2.msra.mxu0 0.0
    %1331 = vmatprep.subr.mxu0 0.0
    %1332 = vmatpush2.msra.mxu0 0.0
    %1333 = vmatprep.subr.mxu0 0.0
    %1334 = vmatpush2.msra.mxu0 0.0
    %1335 = vmatprep.subr.mxu0 0.0
    %1336 = vmatpush2.msra.mxu0 0.0
    %1337 = vmatprep.subr.mxu0 0.0
    %1338 = vmatpush2.msra.mxu0 0.0
    %1339 = vmatprep.mubr.f32.mxu0 0.0
    %1340 = vmatmul.mubr.f32.gmra.mxu0 %v1270
    %v1341 = vpop.f32.mrf.mxu0
    %v1342 = vadd.f32 0.0, %v1341
    %v1343 = vpop.f32.mrf.mxu0
    %v1344 = vadd.f32 0.0, %v1343
    %1345 = vdwg.mxu0
    %1346 = vmatprep.subr.mxu0 %v434
    %1347 = vmatpush1.msra.mxu0 %v433
    %1348 = vmatprep.subr.mxu0 %v430
    %1349 = vmatpush1.msra.mxu0 %v429
    %1350 = vmatprep.subr.mxu0 %v426
    %1351 = vmatpush1.msra.mxu0 %v425
    %1352 = vmatprep.subr.mxu0 %v422
    %1353 = vmatpush1.msra.mxu0 %v421
    %1354 = vmatprep.subr.mxu0 %v418
    %1355 = vmatpush1.msra.mxu0 %v417
    %1356 = vmatprep.subr.mxu0 %v414
    %1357 = vmatpush1.msra.mxu0 %v413
    %1358 = vmatprep.subr.mxu0 %v410
    %1359 = vmatpush1.msra.mxu0 %v409
    %1360 = vmatprep.subr.mxu0 %v406
    %1361 = vmatpush1.msra.mxu0 %v405
    %1362 = vmatprep.subr.mxu0 %v402
    %1363 = vmatpush1.msra.mxu0 %v401
    %1364 = vmatprep.subr.mxu0 %v398
    %1365 = vmatpush1.msra.mxu0 %v397
    %1366 = vmatprep.subr.mxu0 %v394
    %1367 = vmatpush1.msra.mxu0 %v393
    %1368 = vmatprep.subr.mxu0 %v390
    %1369 = vmatpush1.msra.mxu0 %v389
    %1370 = vmatprep.subr.mxu0 %v386
    %1371 = vmatpush1.msra.mxu0 %v385
    %1372 = vmatprep.subr.mxu0 %v382
    %1373 = vmatpush1.msra.mxu0 %v381
    %1374 = vmatprep.subr.mxu0 %v378
    %1375 = vmatpush1.msra.mxu0 %v377
    %1376 = vmatprep.subr.mxu0 %v374
    %1377 = vmatpush1.msra.mxu0 %v373
    %1378 = vmatprep.subr.mxu0 0.0
    %1379 = vmatpush2.msra.mxu0 0.0
    %1380 = vmatprep.subr.mxu0 0.0
    %1381 = vmatpush2.msra.mxu0 0.0
    %1382 = vmatprep.subr.mxu0 0.0
    %1383 = vmatpush2.msra.mxu0 0.0
    %1384 = vmatprep.subr.mxu0 0.0
    %1385 = vmatpush2.msra.mxu0 0.0
    %1386 = vmatprep.subr.mxu0 0.0
    %1387 = vmatpush2.msra.mxu0 0.0
    %1388 = vmatprep.subr.mxu0 0.0
    %1389 = vmatpush2.msra.mxu0 0.0
    %1390 = vmatprep.subr.mxu0 0.0
    %1391 = vmatpush2.msra.mxu0 0.0
    %1392 = vmatprep.subr.mxu0 0.0
    %1393 = vmatpush2.msra.mxu0 0.0
    %1394 = vmatprep.subr.mxu0 0.0
    %1395 = vmatpush2.msra.mxu0 0.0
    %1396 = vmatprep.subr.mxu0 0.0
    %1397 = vmatpush2.msra.mxu0 0.0
    %1398 = vmatprep.subr.mxu0 0.0
    %1399 = vmatpush2.msra.mxu0 0.0
    %1400 = vmatprep.subr.mxu0 0.0
    %1401 = vmatpush2.msra.mxu0 0.0
    %1402 = vmatprep.subr.mxu0 0.0
    %1403 = vmatpush2.msra.mxu0 0.0
    %1404 = vmatprep.subr.mxu0 0.0
    %1405 = vmatpush2.msra.mxu0 0.0
    %1406 = vmatprep.subr.mxu0 0.0
    %1407 = vmatpush2.msra.mxu0 0.0
    %1408 = vmatprep.subr.mxu0 0.0
    %1409 = vmatpush2.msra.mxu0 0.0
    %1410 = vmatprep.mubr.f32.mxu0 0.0
    %1411 = vmatmul.mubr.f32.gmra.mxu0 %v1270
    %v1412 = vpop.f32.mrf.mxu0
    %v1413 = vadd.f32 0.0, %v1412
    %v1414 = vpop.f32.mrf.mxu0
    %v1415 = vadd.f32 0.0, %v1414
    %1416 = vdwg.mxu0
    %v1417 = vadd.f32 %v1271, %v1342
    %v1418 = vadd.f32 %v1272, %v1344
    %v1419 = vadd.f32 %v1273, %v1413
    %v1420 = vadd.f32 %v1274, %v1415
    %v1421 = vmul.f32 %v1417, 0.5
    %v1422 = vtanh.pop %v1421
    %v1423 = vmul.f32 %v1422, 0.5
    %v1424 = vadd.f32 %v1423, 0.5
    %v1425 = vmul.f32 %v1418, 0.5
    %v1426 = vtanh.pop %v1425
    %v1427 = vmul.f32 %v1426, 0.5
    %v1428 = vadd.f32 %v1427, 0.5
    %v1429 = vtanh.pop %v1419
    %v1430 = vmul.f32 %v1420, 0.5
    %v1431 = vtanh.pop %v1430
    %v1432 = vmul.f32 %v1431, 0.5
    %v1433 = vadd.f32 %v1432, 0.5
    %v1434 = vmul.f32 %v1428, %v1268
    %v1435 = vmul.f32 %v1424, %v1429
    %v1436 = vadd.f32 %v1434, %v1435
    %v1437 = vtanh.pop %v1436
    %v1438 = vmul.f32 %v1433, %v1437
    %v1439 = vld [vmem:[#allocation2 + $0xc0] sm:$0xff]
    %v1440 = vld [vmem:[#allocation2 + $0xc8] sm:$0xff]
    %v1441 = vld [vmem:[#allocation2 + $0xd0] sm:$0xff]
    %v1442 = vld [vmem:[#allocation2 + $0xd8] sm:$0xff]
    %1443 = vmatprep.subr.mxu0 %v432
    %1444 = vmatpush1.msra.mxu0 %v431
    %1445 = vmatprep.subr.mxu0 %v428
    %1446 = vmatpush1.msra.mxu0 %v427
    %1447 = vmatprep.subr.mxu0 %v424
    %1448 = vmatpush1.msra.mxu0 %v423
    %1449 = vmatprep.subr.mxu0 %v420
    %1450 = vmatpush1.msra.mxu0 %v419
    %1451 = vmatprep.subr.mxu0 %v416
    %1452 = vmatpush1.msra.mxu0 %v415
    %1453 = vmatprep.subr.mxu0 %v412
    %1454 = vmatpush1.msra.mxu0 %v411
    %1455 = vmatprep.subr.mxu0 %v408
    %1456 = vmatpush1.msra.mxu0 %v407
    %1457 = vmatprep.subr.mxu0 %v404
    %1458 = vmatpush1.msra.mxu0 %v403
    %1459 = vmatprep.subr.mxu0 %v400
    %1460 = vmatpush1.msra.mxu0 %v399
    %1461 = vmatprep.subr.mxu0 %v396
    %1462 = vmatpush1.msra.mxu0 %v395
    %1463 = vmatprep.subr.mxu0 %v392
    %1464 = vmatpush1.msra.mxu0 %v391
    %1465 = vmatprep.subr.mxu0 %v388
    %1466 = vmatpush1.msra.mxu0 %v387
    %1467 = vmatprep.subr.mxu0 %v384
    %1468 = vmatpush1.msra.mxu0 %v383
    %1469 = vmatprep.subr.mxu0 %v380
    %1470 = vmatpush1.msra.mxu0 %v379
    %1471 = vmatprep.subr.mxu0 %v376
    %1472 = vmatpush1.msra.mxu0 %v375
    %1473 = vmatprep.subr.mxu0 %v372
    %1474 = vmatpush1.msra.mxu0 %v371
    %1475 = vmatprep.subr.mxu0 0.0
    %1476 = vmatpush2.msra.mxu0 0.0
    %1477 = vmatprep.subr.mxu0 0.0
    %1478 = vmatpush2.msra.mxu0 0.0
    %1479 = vmatprep.subr.mxu0 0.0
    %1480 = vmatpush2.msra.mxu0 0.0
    %1481 = vmatprep.subr.mxu0 0.0
    %1482 = vmatpush2.msra.mxu0 0.0
    %1483 = vmatprep.subr.mxu0 0.0
    %1484 = vmatpush2.msra.mxu0 0.0
    %1485 = vmatprep.subr.mxu0 0.0
    %1486 = vmatpush2.msra.mxu0 0.0
    %1487 = vmatprep.subr.mxu0 0.0
    %1488 = vmatpush2.msra.mxu0 0.0
    %1489 = vmatprep.subr.mxu0 0.0
    %1490 = vmatpush2.msra.mxu0 0.0
    %1491 = vmatprep.subr.mxu0 0.0
    %1492 = vmatpush2.msra.mxu0 0.0
    %1493 = vmatprep.subr.mxu0 0.0
    %1494 = vmatpush2.msra.mxu0 0.0
    %1495 = vmatprep.subr.mxu0 0.0
    %1496 = vmatpush2.msra.mxu0 0.0
    %1497 = vmatprep.subr.mxu0 0.0
    %1498 = vmatpush2.msra.mxu0 0.0
    %1499 = vmatprep.subr.mxu0 0.0
    %1500 = vmatpush2.msra.mxu0 0.0
    %1501 = vmatprep.subr.mxu0 0.0
    %1502 = vmatpush2.msra.mxu0 0.0
    %1503 = vmatprep.subr.mxu0 0.0
    %1504 = vmatpush2.msra.mxu0 0.0
    %1505 = vmatprep.subr.mxu0 0.0
    %1506 = vmatpush2.msra.mxu0 0.0
    %1507 = vmatprep.mubr.f32.mxu0 0.0
    %1508 = vmatmul.mubr.f32.gmra.mxu0 %v1438
    %v1509 = vpop.f32.mrf.mxu0
    %v1510 = vadd.f32 0.0, %v1509
    %v1511 = vpop.f32.mrf.mxu0
    %v1512 = vadd.f32 0.0, %v1511
    %1513 = vdwg.mxu0
    %1514 = vmatprep.subr.mxu0 %v434
    %1515 = vmatpush1.msra.mxu0 %v433
    %1516 = vmatprep.subr.mxu0 %v430
    %1517 = vmatpush1.msra.mxu0 %v429
    %1518 = vmatprep.subr.mxu0 %v426
    %1519 = vmatpush1.msra.mxu0 %v425
    %1520 = vmatprep.subr.mxu0 %v422
    %1521 = vmatpush1.msra.mxu0 %v421
    %1522 = vmatprep.subr.mxu0 %v418
    %1523 = vmatpush1.msra.mxu0 %v417
    %1524 = vmatprep.subr.mxu0 %v414
    %1525 = vmatpush1.msra.mxu0 %v413
    %1526 = vmatprep.subr.mxu0 %v410
    %1527 = vmatpush1.msra.mxu0 %v409
    %1528 = vmatprep.subr.mxu0 %v406
    %1529 = vmatpush1.msra.mxu0 %v405
    %1530 = vmatprep.subr.mxu0 %v402
    %1531 = vmatpush1.msra.mxu0 %v401
    %1532 = vmatprep.subr.mxu0 %v398
    %1533 = vmatpush1.msra.mxu0 %v397
    %1534 = vmatprep.subr.mxu0 %v394
    %1535 = vmatpush1.msra.mxu0 %v393
    %1536 = vmatprep.subr.mxu0 %v390
    %1537 = vmatpush1.msra.mxu0 %v389
    %1538 = vmatprep.subr.mxu0 %v386
    %1539 = vmatpush1.msra.mxu0 %v385
    %1540 = vmatprep.subr.mxu0 %v382
    %1541 = vmatpush1.msra.mxu0 %v381
    %1542 = vmatprep.subr.mxu0 %v378
    %1543 = vmatpush1.msra.mxu0 %v377
    %1544 = vmatprep.subr.mxu0 %v374
    %1545 = vmatpush1.msra.mxu0 %v373
    %1546 = vmatprep.subr.mxu0 0.0
    %1547 = vmatpush2.msra.mxu0 0.0
    %1548 = vmatprep.subr.mxu0 0.0
    %1549 = vmatpush2.msra.mxu0 0.0
    %1550 = vmatprep.subr.mxu0 0.0
    %1551 = vmatpush2.msra.mxu0 0.0
    %1552 = vmatprep.subr.mxu0 0.0
    %1553 = vmatpush2.msra.mxu0 0.0
    %1554 = vmatprep.subr.mxu0 0.0
    %1555 = vmatpush2.msra.mxu0 0.0
    %1556 = vmatprep.subr.mxu0 0.0
    %1557 = vmatpush2.msra.mxu0 0.0
    %1558 = vmatprep.subr.mxu0 0.0
    %1559 = vmatpush2.msra.mxu0 0.0
    %1560 = vmatprep.subr.mxu0 0.0
    %1561 = vmatpush2.msra.mxu0 0.0
    %1562 = vmatprep.subr.mxu0 0.0
    %1563 = vmatpush2.msra.mxu0 0.0
    %1564 = vmatprep.subr.mxu0 0.0
    %1565 = vmatpush2.msra.mxu0 0.0
    %1566 = vmatprep.subr.mxu0 0.0
    %1567 = vmatpush2.msra.mxu0 0.0
    %1568 = vmatprep.subr.mxu0 0.0
    %1569 = vmatpush2.msra.mxu0 0.0
    %1570 = vmatprep.subr.mxu0 0.0
    %1571 = vmatpush2.msra.mxu0 0.0
    %1572 = vmatprep.subr.mxu0 0.0
    %1573 = vmatpush2.msra.mxu0 0.0
    %1574 = vmatprep.subr.mxu0 0.0
    %1575 = vmatpush2.msra.mxu0 0.0
    %1576 = vmatprep.subr.mxu0 0.0
    %1577 = vmatpush2.msra.mxu0 0.0
    %1578 = vmatprep.mubr.f32.mxu0 0.0
    %1579 = vmatmul.mubr.f32.gmra.mxu0 %v1438
    %v1580 = vpop.f32.mrf.mxu0
    %v1581 = vadd.f32 0.0, %v1580
    %v1582 = vpop.f32.mrf.mxu0
    %v1583 = vadd.f32 0.0, %v1582
    %1584 = vdwg.mxu0
    %v1585 = vadd.f32 %v1439, %v1510
    %v1586 = vadd.f32 %v1440, %v1512
    %v1587 = vadd.f32 %v1441, %v1581
    %v1588 = vadd.f32 %v1442, %v1583
    %v1589 = vmul.f32 %v1585, 0.5
    %v1590 = vtanh.pop %v1589
    %v1591 = vmul.f32 %v1590, 0.5
    %v1592 = vadd.f32 %v1591, 0.5
    %v1593 = vmul.f32 %v1586, 0.5
    %v1594 = vtanh.pop %v1593
    %v1595 = vmul.f32 %v1594, 0.5
    %v1596 = vadd.f32 %v1595, 0.5
    %v1597 = vtanh.pop %v1587
    %v1598 = vmul.f32 %v1588, 0.5
    %v1599 = vtanh.pop %v1598
    %v1600 = vmul.f32 %v1599, 0.5
    %v1601 = vadd.f32 %v1600, 0.5
    %v1602 = vmul.f32 %v1596, %v1436
    %v1603 = vmul.f32 %v1592, %v1597
    %v1604 = vadd.f32 %v1602, %v1603
    %v1605 = vtanh.pop %v1604
    %v1606 = vmul.f32 %v1601, %v1605
    %v1607 = vld [vmem:[#allocation2 + $0xe0] sm:$0xff]
    %v1608 = vld [vmem:[#allocation2 + $0xe8] sm:$0xff]
    %v1609 = vld [vmem:[#allocation2 + $0xf0] sm:$0xff]
    %v1610 = vld [vmem:[#allocation2 + $0xf8] sm:$0xff]
    %1611 = vmatprep.subr.mxu0 %v432
    %1612 = vmatpush1.msra.mxu0 %v431
    %1613 = vmatprep.subr.mxu0 %v428
    %1614 = vmatpush1.msra.mxu0 %v427
    %1615 = vmatprep.subr.mxu0 %v424
    %1616 = vmatpush1.msra.mxu0 %v423
    %1617 = vmatprep.subr.mxu0 %v420
    %1618 = vmatpush1.msra.mxu0 %v419
    %1619 = vmatprep.subr.mxu0 %v416
    %1620 = vmatpush1.msra.mxu0 %v415
    %1621 = vmatprep.subr.mxu0 %v412
    %1622 = vmatpush1.msra.mxu0 %v411
    %1623 = vmatprep.subr.mxu0 %v408
    %1624 = vmatpush1.msra.mxu0 %v407
    %1625 = vmatprep.subr.mxu0 %v404
    %1626 = vmatpush1.msra.mxu0 %v403
    %1627 = vmatprep.subr.mxu0 %v400
    %1628 = vmatpush1.msra.mxu0 %v399
    %1629 = vmatprep.subr.mxu0 %v396
    %1630 = vmatpush1.msra.mxu0 %v395
    %1631 = vmatprep.subr.mxu0 %v392
    %1632 = vmatpush1.msra.mxu0 %v391
    %1633 = vmatprep.subr.mxu0 %v388
    %1634 = vmatpush1.msra.mxu0 %v387
    %1635 = vmatprep.subr.mxu0 %v384
    %1636 = vmatpush1.msra.mxu0 %v383
    %1637 = vmatprep.subr.mxu0 %v380
    %1638 = vmatpush1.msra.mxu0 %v379
    %1639 = vmatprep.subr.mxu0 %v376
    %1640 = vmatpush1.msra.mxu0 %v375
    %1641 = vmatprep.subr.mxu0 %v372
    %1642 = vmatpush1.msra.mxu0 %v371
    %1643 = vmatprep.subr.mxu0 0.0
    %1644 = vmatpush2.msra.mxu0 0.0
    %1645 = vmatprep.subr.mxu0 0.0
    %1646 = vmatpush2.msra.mxu0 0.0
    %1647 = vmatprep.subr.mxu0 0.0
    %1648 = vmatpush2.msra.mxu0 0.0
    %1649 = vmatprep.subr.mxu0 0.0
    %1650 = vmatpush2.msra.mxu0 0.0
    %1651 = vmatprep.subr.mxu0 0.0
    %1652 = vmatpush2.msra.mxu0 0.0
    %1653 = vmatprep.subr.mxu0 0.0
    %1654 = vmatpush2.msra.mxu0 0.0
    %1655 = vmatprep.subr.mxu0 0.0
    %1656 = vmatpush2.msra.mxu0 0.0
    %1657 = vmatprep.subr.mxu0 0.0
    %1658 = vmatpush2.msra.mxu0 0.0
    %1659 = vmatprep.subr.mxu0 0.0
    %1660 = vmatpush2.msra.mxu0 0.0
    %1661 = vmatprep.subr.mxu0 0.0
    %1662 = vmatpush2.msra.mxu0 0.0
    %1663 = vmatprep.subr.mxu0 0.0
    %1664 = vmatpush2.msra.mxu0 0.0
    %1665 = vmatprep.subr.mxu0 0.0
    %1666 = vmatpush2.msra.mxu0 0.0
    %1667 = vmatprep.subr.mxu0 0.0
    %1668 = vmatpush2.msra.mxu0 0.0
    %1669 = vmatprep.subr.mxu0 0.0
    %1670 = vmatpush2.msra.mxu0 0.0
    %1671 = vmatprep.subr.mxu0 0.0
    %1672 = vmatpush2.msra.mxu0 0.0
    %1673 = vmatprep.subr.mxu0 0.0
    %1674 = vmatpush2.msra.mxu0 0.0
    %1675 = vmatprep.mubr.f32.mxu0 0.0
    %1676 = vmatmul.mubr.f32.gmra.mxu0 %v1606
    %v1677 = vpop.f32.mrf.mxu0
    %v1678 = vadd.f32 0.0, %v1677
    %v1679 = vpop.f32.mrf.mxu0
    %v1680 = vadd.f32 0.0, %v1679
    %1681 = vdwg.mxu0
    %1682 = vmatprep.subr.mxu0 %v434
    %1683 = vmatpush1.msra.mxu0 %v433
    %1684 = vmatprep.subr.mxu0 %v430
    %1685 = vmatpush1.msra.mxu0 %v429
    %1686 = vmatprep.subr.mxu0 %v426
    %1687 = vmatpush1.msra.mxu0 %v425
    %1688 = vmatprep.subr.mxu0 %v422
    %1689 = vmatpush1.msra.mxu0 %v421
    %1690 = vmatprep.subr.mxu0 %v418
    %1691 = vmatpush1.msra.mxu0 %v417
    %1692 = vmatprep.subr.mxu0 %v414
    %1693 = vmatpush1.msra.mxu0 %v413
    %1694 = vmatprep.subr.mxu0 %v410
    %1695 = vmatpush1.msra.mxu0 %v409
    %1696 = vmatprep.subr.mxu0 %v406
    %1697 = vmatpush1.msra.mxu0 %v405
    %1698 = vmatprep.subr.mxu0 %v402
    %1699 = vmatpush1.msra.mxu0 %v401
    %1700 = vmatprep.subr.mxu0 %v398
    %1701 = vmatpush1.msra.mxu0 %v397
    %1702 = vmatprep.subr.mxu0 %v394
    %1703 = vmatpush1.msra.mxu0 %v393
    %1704 = vmatprep.subr.mxu0 %v390
    %1705 = vmatpush1.msra.mxu0 %v389
    %1706 = vmatprep.subr.mxu0 %v386
    %1707 = vmatpush1.msra.mxu0 %v385
    %1708 = vmatprep.subr.mxu0 %v382
    %1709 = vmatpush1.msra.mxu0 %v381
    %1710 = vmatprep.subr.mxu0 %v378
    %1711 = vmatpush1.msra.mxu0 %v377
    %1712 = vmatprep.subr.mxu0 %v374
    %1713 = vmatpush1.msra.mxu0 %v373
    %1714 = vmatprep.subr.mxu0 0.0
    %1715 = vmatpush2.msra.mxu0 0.0
    %1716 = vmatprep.subr.mxu0 0.0
    %1717 = vmatpush2.msra.mxu0 0.0
    %1718 = vmatprep.subr.mxu0 0.0
    %1719 = vmatpush2.msra.mxu0 0.0
    %1720 = vmatprep.subr.mxu0 0.0
    %1721 = vmatpush2.msra.mxu0 0.0
    %1722 = vmatprep.subr.mxu0 0.0
    %1723 = vmatpush2.msra.mxu0 0.0
    %1724 = vmatprep.subr.mxu0 0.0
    %1725 = vmatpush2.msra.mxu0 0.0
    %1726 = vmatprep.subr.mxu0 0.0
    %1727 = vmatpush2.msra.mxu0 0.0
    %1728 = vmatprep.subr.mxu0 0.0
    %1729 = vmatpush2.msra.mxu0 0.0
    %1730 = vmatprep.subr.mxu0 0.0
    %1731 = vmatpush2.msra.mxu0 0.0
    %1732 = vmatprep.subr.mxu0 0.0
    %1733 = vmatpush2.msra.mxu0 0.0
    %1734 = vmatprep.subr.mxu0 0.0
    %1735 = vmatpush2.msra.mxu0 0.0
    %1736 = vmatprep.subr.mxu0 0.0
    %1737 = vmatpush2.msra.mxu0 0.0
    %1738 = vmatprep.subr.mxu0 0.0
    %1739 = vmatpush2.msra.mxu0 0.0
    %1740 = vmatprep.subr.mxu0 0.0
    %1741 = vmatpush2.msra.mxu0 0.0
    %1742 = vmatprep.subr.mxu0 0.0
    %1743 = vmatpush2.msra.mxu0 0.0
    %1744 = vmatprep.subr.mxu0 0.0
    %1745 = vmatpush2.msra.mxu0 0.0
    %1746 = vmatprep.mubr.f32.mxu0 0.0
    %1747 = vmatmul.mubr.f32.gmra.mxu0 %v1606
    %v1748 = vpop.f32.mrf.mxu0
    %v1749 = vadd.f32 0.0, %v1748
    %v1750 = vpop.f32.mrf.mxu0
    %v1751 = vadd.f32 0.0, %v1750
    %1752 = vdwg.mxu0
    %v1753 = vadd.f32 %v1607, %v1678
    %v1754 = vadd.f32 %v1608, %v1680
    %v1755 = vadd.f32 %v1609, %v1749
    %v1756 = vadd.f32 %v1610, %v1751
    %v1757 = vmul.f32 %v1753, 0.5
    %v1758 = vtanh.pop %v1757
    %v1759 = vmul.f32 %v1758, 0.5
    %v1760 = vadd.f32 %v1759, 0.5
    %v1761 = vmul.f32 %v1754, 0.5
    %v1762 = vtanh.pop %v1761
    %v1763 = vmul.f32 %v1762, 0.5
    %v1764 = vadd.f32 %v1763, 0.5
    %v1765 = vtanh.pop %v1755
    %v1766 = vmul.f32 %v1756, 0.5
    %v1767 = vtanh.pop %v1766
    %v1768 = vmul.f32 %v1767, 0.5
    %v1769 = vadd.f32 %v1768, 0.5
    %v1770 = vmul.f32 %v1764, %v1604
    %v1771 = vmul.f32 %v1760, %v1765
    %v1772 = vadd.f32 %v1770, %v1771
    %v1773 = vtanh.pop %v1772
    %v1774 = vmul.f32 %v1769, %v1773
    %v1775 = vld [vmem:[%s4] sm:$0x1]
    %v1777 = vlaneseq
    %v1778 = vshrl.u32 %v1777, 7
    %v1779 = vsub.s32 0, %v1778
    %v1780 = vrot.slane %v1775, %v1779
    %v1782 = vmul.f32 %v1774, %v1780
    %1783 = vadd.xlane.f32.xlu0 %v1782
    %v1784 = vpop.xlane.xlu0 %1783
    %v1785 = vld [vmem:[#allocation3] sm:$0x1]
    %v1787 = vlaneseq
    %v1788 = vshrl.u32 %v1787, 7
    %v1789 = vsub.s32 0, %v1788
    %v1790 = vrot.slane %v1785, %v1789
    %v1792 = vadd.f32 %v1784, %v1790
    %vm1793 = vcmask 7168
    %1794 = vst.msk [vmem:[%s6] sm:$0xff] %vm1793, %v1792
    // Predicated region
    $region30: #{tpu_custom_call.1} parent=1 // pred_check
      _
    $region31: #{tpu_custom_call.1} parent=1 // pred_check_branch
      %1796 = sbr.rel (0) target = $region33
    $region32: #{tpu_custom_call.1} parent=1 // pred_region
      _
    $region33: #{tpu_custom_call.1} parent=1 // pred_fallthru
      _
    // Predicated region
    $region34: #{tpu_custom_call.1} parent=1 // pred_check
      _
    $region35: #{tpu_custom_call.1} parent=1 // pred_check_branch
      %1798 = sbr.rel (0) target = $region37
    $region36: #{tpu_custom_call.1} parent=1 // pred_region
      _
    $region37: #{tpu_custom_call.1} parent=1 // pred_fallthru
      _
    %1799 = vsyncpa [#allocation5], 1

</llo_original>
